<compile_context>
chip_gen: v7x
topology: tpu7x:2x2x1
jax: 0.10.0
libtpu: 0.0.40
codegen_flags: <defaults>
</compile_context>

<pallas_src>
import functools

import jax
import jax.numpy as jnp
from jax.experimental import pallas as pl
from jax.experimental.pallas import tpu as pltpu


# ----------------------------------------------------------------------------
# helpers
# ----------------------------------------------------------------------------
def _fit_tile(dim, pref, align):
    """Largest tile <= pref (multiple of `align`) that divides dim, else the full dim."""
    if dim <= pref:
        return dim
    t = (pref // align) * align
    while t >= align:
        if dim % t == 0:
            return t
        t -= align
    return dim


def _vmem_limit_bytes():
    """Per-generation scoped-VMEM budget (v5e/v6e: 128 MiB physical, v7x: 64 MiB)."""
    try:
        cap = pltpu.get_tpu_info().vmem_capacity_bytes
    except Exception:
        cap = 64 * 1024 * 1024
    return int(min(cap * 0.6, 100 * 1024 * 1024))


_VMEM_LIMIT = _vmem_limit_bytes()


def _chunk_rows(h, wp, tn, budget=128 * 1024, max_chunks=8):
    """Row-group chunk so the per-chunk f32 accumulator stays register/VMEM friendly."""
    ch = max(1, budget // (wp * tn * 4))
    ch = max(ch, -(-h // max_chunks))
    ch = min(ch, h)
    while h % ch:
        ch += 1
    return ch


# ----------------------------------------------------------------------------
# canonical padded activation layout
# ----------------------------------------------------------------------------
def to_canonical(x_nhwc, wp, pad=2):
    """Embed NHWC into (N, (H+2*pad)*wp, C); image row h -> row-group h+pad, col w -> w."""
    N, H, W, C = x_nhwc.shape
    buf = jnp.zeros((N, H + 2 * pad, wp, C), x_nhwc.dtype)
    buf = buf.at[:, pad:pad + H, :W, :].set(x_nhwc)
    return buf.reshape(N, (H + 2 * pad) * wp, C)


def from_canonical(xc, h, w, wp, pad=2):
    N, _, C = xc.shape
    x4 = xc.reshape(N, -1, wp, C)
    return x4[:, pad:pad + h, :w, :]


# ----------------------------------------------------------------------------
# Pallas kernel 1: tiled matmul with fused bias + optional ReLU (bf16 MXU, f32 acc)
# ----------------------------------------------------------------------------
def _matmul_bias_act_kernel(a_ref, b_ref, bias_ref, o_ref, acc_ref, *, relu):
    @pl.when(pl.program_id(2) == 0)
    def _():
        acc_ref[...] = jnp.zeros_like(acc_ref)

    acc_ref[...] += jnp.dot(a_ref[...], b_ref[...],
                            preferred_element_type=jnp.float32)

    @pl.when(pl.program_id(2) == pl.num_programs(2) - 1)
    def _():
        out = acc_ref[...] + bias_ref[...]
        if relu:
            out = jnp.maximum(out, 0.0)
        o_ref[...] = out.astype(o_ref.dtype)


def matmul_bias_act(a, b, bias, *, relu=True, out_dtype=jnp.float32,
                    tm=256, tn=512, tk=2048):
    """act(a @ b + bias): a:(M,K), b:(K,N), bias:(N,) -> (M,N).  bf16 MXU, f32 acc."""
    M, K = a.shape
    K2, N = b.shape
    assert K == K2 and bias.shape == (N,)
    a = a.astype(jnp.bfloat16)
    b = b.astype(jnp.bfloat16)
    bias2d = bias.astype(jnp.float32).reshape(1, N)

    tm = _fit_tile(M, tm, 8)
    tn = _fit_tile(N, tn, 128)
    tk = _fit_tile(K, tk, 128)
    grid = (M // tm, N // tn, K // tk)

    return pl.pallas_call(
        functools.partial(_matmul_bias_act_kernel, relu=relu),
        out_shape=jax.ShapeDtypeStruct((M, N), out_dtype),
        grid_spec=pltpu.PrefetchScalarGridSpec(
            num_scalar_prefetch=0,
            grid=grid,
            in_specs=[
                pl.BlockSpec((tm, tk), lambda i, j, k: (i, k)),
                pl.BlockSpec((tk, tn), lambda i, j, k: (k, j)),
                pl.BlockSpec((1, tn), lambda i, j, k: (0, j)),
            ],
            out_specs=pl.BlockSpec((tm, tn), lambda i, j, k: (i, j)),
            scratch_shapes=[pltpu.VMEM((tm, tn), jnp.float32)],
        ),
        compiler_params=pltpu.CompilerParams(
            dimension_semantics=("parallel", "parallel", "arbitrary"),
            vmem_limit_bytes=_VMEM_LIMIT),
    )(a, b, bias2d)


# ----------------------------------------------------------------------------
# Pallas kernel 2: fused 3x3 conv (pad 1, stride 1) + bias + ReLU on canonical layout
# ----------------------------------------------------------------------------
def _conv3x3_kernel(x_ref, w_ref, b_ref, o_ref, *, wp, w_img, h_img, p_out, ch):
    # x_ref : (1, (h_img+4)*wp, Ci)   canonical padded input (2 pad row-groups each side)
    # w_ref : (9, Ci, tn)             taps in (kh, kw) order, bf16
    # b_ref : (1, tn)                 f32 bias
    # o_ref : (1, (h_img+2*p_out)*wp, tn)  canonical padded output, bf16
    tn = o_ref.shape[-1]
    m_out = h_img * wp
    pad = p_out * wp

    # zero the top/bottom pad row-groups of the output (so it is directly consumable
    # as the next layer's canonical, zero-padded input)
    zeros_pad = jnp.zeros((pad, tn), dtype=o_ref.dtype)
    o_ref[0, 0:pad, :] = zeros_pad
    o_ref[0, pad + m_out:pad + m_out + pad, :] = zeros_pad

    # pad-column mask (hoisted out of the chunk loop); column index within each
    # wp-wide row-group must be < w_img
    col = jax.lax.broadcasted_iota(jnp.int32, (ch * wp, 1), 0) % wp
    valid = col < w_img
    bias = b_ref[...]                                   # (1, tn) f32

    for c in range(h_img // ch):
        base = c * ch * wp
        acc = None                                      # f32 accumulation in vregs
        for dh in range(3):
            for dw in range(3):
                # input row-group shift (dh+1)*wp is sublane-aligned (wp % 8 == 0 for
                # the large layers); only dw in {0,2} is off by one lane of sublanes.
                off = (dh + 1) * wp + (dw - 1)
                lhs = x_ref[0, base + off: base + off + ch * wp, :]
                contrib = jnp.dot(lhs, w_ref[dh * 3 + dw],
                                  preferred_element_type=jnp.float32)
                acc = contrib if acc is None else acc + contrib
        res = jnp.maximum(acc + bias, 0.0)              # fused bias + ReLU (f32)
        res = jnp.where(valid, res, 0.0)                # zero the garbage pad columns
        # aligned shifted store straight into the next layer's canonical layout
        o_ref[0, pad + base: pad + base + ch * wp, :] = res.astype(o_ref.dtype)


def conv3x3_relu_canon(x, w_taps, bias, h, w, wp, p_out):
    """3x3 conv + ReLU on the canonical layout.

    x      : (N, (h+4)*wp, Ci) bf16 canonical input (2 pad row-groups top/bottom)
    output : (N, (h+2*p_out)*wp, Co) bf16 canonical output (p_out = 2 if the next layer
             is a conv, 4 if the next layer is a 2x2 pool).
    """
    N, R, Ci = x.shape
    assert R == (h + 4) * wp, (R, h, wp)
    assert w_taps.shape[:2] == (9, Ci)
    Co = w_taps.shape[2]
    tn = Co if Co <= 256 else 256
    assert Co % tn == 0

    g_out = h + 2 * p_out
    ch = _chunk_rows(h, wp, tn)
    bias2d = bias.astype(jnp.float32).reshape(1, Co)

    return pl.pallas_call(
        functools.partial(_conv3x3_kernel, wp=wp, w_img=w, h_img=h,
                          p_out=p_out, ch=ch),
        out_shape=jax.ShapeDtypeStruct((N, g_out * wp, Co), jnp.bfloat16),
        grid_spec=pltpu.PrefetchScalarGridSpec(
            num_scalar_prefetch=0,
            # Co-block outer / batch inner -> the weight block stays resident across
            # the batch (no redundant weight DMAs).
            grid=(Co // tn, N),
            in_specs=[
                pl.BlockSpec((1, R, Ci), lambda j, n: (n, 0, 0)),
                pl.BlockSpec((9, Ci, tn), lambda j, n: (0, 0, j)),
                pl.BlockSpec((1, tn), lambda j, n: (0, j)),
            ],
            out_specs=pl.BlockSpec((1, g_out * wp, tn), lambda j, n: (n, 0, j)),
        ),
        compiler_params=pltpu.CompilerParams(
            dimension_semantics=("parallel", "parallel"),
            vmem_limit_bytes=_VMEM_LIMIT),
    )(x, w_taps, bias2d)


# ----------------------------------------------------------------------------
# Pallas kernel 3: pair-max (2x2 max-pool directly on the canonical layout)
# ----------------------------------------------------------------------------
def _pairmax_kernel(x_ref, o_ref):
    half = o_ref.shape[1]
    o_ref[...] = jnp.maximum(x_ref[:, :half], x_ref[:, half:])


def _pairmax(x2d, half):
    R, W2 = x2d.shape
    assert W2 == 2 * half
    tb = _fit_tile(R, 512, 8)
    return pl.pallas_call(
        _pairmax_kernel,
        out_shape=jax.ShapeDtypeStruct((R, half), x2d.dtype),
        grid_spec=pltpu.PrefetchScalarGridSpec(
            num_scalar_prefetch=0,
            grid=(R // tb,),
            in_specs=[pl.BlockSpec((tb, W2), lambda i: (i, 0))],
            out_specs=pl.BlockSpec((tb, half), lambda i: (i, 0)),
        ),
        compiler_params=pltpu.CompilerParams(
            dimension_semantics=("parallel",),
            vmem_limit_bytes=_VMEM_LIMIT),
    )(x2d)


def maxpool2x2_canon(xc, wp):
    """2x2 / stride-2 max pool directly on the canonical padded layout.

    The preceding conv was written with p_out=4 (4 zero pad row-groups each side), so
    pooling the WHOLE padded array (including pads) lands exactly in the next conv's
    canonical layout (2 pad row-groups, width wp//2) — no crop/pad HBM round trips.
    Both stages use only free contiguous reshapes; the H-pair max runs first on a
    lane-dense (2*wp*C wide) view.
    """
    N, R, C = xc.shape
    G = R // wp
    assert G * wp == R and G % 2 == 0 and wp % 2 == 0
    s1 = _pairmax(xc.reshape(N * (G // 2), 2 * wp * C), wp * C)       # H-pair max
    s2 = _pairmax(s1.reshape(N * (G // 2) * (wp // 2), 2 * C), C)     # W-pair max
    return s2.reshape(N, (G // 2) * (wp // 2), C)


# ----------------------------------------------------------------------------
# VGG16 (cfg "D") structure, scaled down for the demo run
# ----------------------------------------------------------------------------
_VGG16_CFG_FULL = [64, 64, 'M', 128, 128, 'M', 256, 256, 256, 'M',
                   512, 512, 512, 'M', 512, 512, 512, 'M']
_WIDTH_DIV = 8                                   # scaled widths for a fast demo run
_CFG = [v if v == 'M' else v // _WIDTH_DIV for v in _VGG16_CFG_FULL]
_FC_HIDDEN = 256                                 # scaled from 4096
_CIN_PAD = 8                                     # pad RGB 3 -> 8 channels (zeros)


def init_params(key, cfg=_CFG, in_spatial=32, fc_hidden=_FC_HIDDEN):
    params = {'conv': []}
    cin = 3
    first = True
    for v in cfg:
        if v == 'M':
            continue
        key, kw, kb = jax.random.split(key, 3)
        fan_in = cin * 9
        # generated in PyTorch OIHW layout, converted to tap-major (kh*3+kw, Ci, Co)
        w_oihw = jax.random.normal(kw, (v, cin, 3, 3), jnp.float32) * (2.0 / fan_in) ** 0.5
        b = jax.random.normal(kb, (v,), jnp.float32) * 0.01
        w_taps = jnp.transpose(w_oihw, (2, 3, 1, 0)).reshape(9, cin, v)
        if first:
            # zero-pad layer-1 input channels 3 -> _CIN_PAD (input padded identically)
            w_taps = jnp.pad(w_taps, ((0, 0), (0, _CIN_PAD - cin), (0, 0)))
            first = False
        params['conv'].append((w_taps.astype(jnp.bfloat16), b.astype(jnp.float32)))
        cin = v

    n_pool = sum(1 for v in cfg if v == 'M')
    feat_hw = in_spatial // (2 ** n_pool)
    flat = cin * feat_hw * feat_hw

    key, k1, k2, k3, k4 = jax.random.split(key, 5)
    # torch Linear stores (out, in); keep transposed (in, out) so y = x @ W + b
    w1 = jax.random.normal(k1, (fc_hidden, flat), jnp.float32) * (1.0 / flat) ** 0.5
    b1 = jax.random.normal(k2, (fc_hidden,), jnp.float32) * 0.01
    w2 = jax.random.normal(k3, (fc_hidden, fc_hidden), jnp.float32) * (1.0 / fc_hidden) ** 0.5
    b2 = jax.random.normal(k4, (fc_hidden,), jnp.float32) * 0.01
    params['fc1'] = (jnp.transpose(w1).astype(jnp.bfloat16), b1.astype(jnp.float32))
    params['fc2'] = (jnp.transpose(w2).astype(jnp.bfloat16), b2.astype(jnp.float32))
    return params


def vgg16_modified_forward(params, x_nchw, cfg=_CFG):
    """Returns (features NCHW, y) like the PyTorch module's forward."""
    x = jnp.transpose(x_nchw, (0, 2, 3, 1)).astype(jnp.bfloat16)     # NCHW -> NHWC, bf16
    x = jnp.pad(x, ((0, 0), (0, 0), (0, 0), (0, _CIN_PAD - x.shape[-1])))
    N, H, W, _ = x.shape

    n_pools = sum(1 for v in cfg if v == 'M')
    align = 1 << n_pools
    # Wp divisible by 2**n_pools (so it halves cleanly with every pool) and >= W + align
    # (so every downstream layer keeps at least one zero pad column); multiple of 8.
    wp = ((W + align) + align - 1) // align * align

    xc = to_canonical(x, wp)                           # one-time, cheap embed
    h, w_cur = H, W
    ci = 0
    for idx, v in enumerate(cfg):
        if v == 'M':
            xc = maxpool2x2_canon(xc, wp)
            h //= 2
            w_cur //= 2
            wp //= 2
        else:
            w_taps, b = params['conv'][ci]
            ci += 1
            next_pool = idx + 1 < len(cfg) and cfg[idx + 1] == 'M'
            xc = conv3x3_relu_canon(xc, w_taps, b, h, w_cur, wp,
                                    p_out=4 if next_pool else 2)

    features = jnp.transpose(from_canonical(xc, h, w_cur, wp),
                             (0, 3, 1, 2)).astype(jnp.float32)        # back to NCHW
    flat = features.reshape(features.shape[0], -1)                    # == .view(-1, C*H*W)

    w1, b1 = params['fc1']
    w2, b2 = params['fc2']
    y = matmul_bias_act(flat, w1, b1, relu=True, out_dtype=jnp.bfloat16)  # Linear + ReLU
    # Dropout(p=0.5): identity (eval mode)  # TODO(synk): train-mode dropout not modeled
    y = matmul_bias_act(y, w2, b2, relu=True, out_dtype=jnp.float32)      # Linear + ReLU
    # Dropout(p=0.5): identity (eval mode)
    return features, y


def _self_check():
    """Small conv(+p_out=4) -> pool check of the canonical-layout kernels vs lax."""
    kb, kw, kx = jax.random.split(jax.random.PRNGKey(1), 3)
    Ci, Co, Ht, Wt, wpt = 8, 16, 8, 8, 16
    xt = jax.random.normal(kx, (2, Ht, Wt, Ci), jnp.float32).astype(jnp.bfloat16)
    wt = (jax.random.normal(kw, (3, 3, Ci, Co), jnp.float32) * 0.2).astype(jnp.bfloat16)
    bt = jax.random.normal(kb, (Co,), jnp.float32) * 0.1

    yc = conv3x3_relu_canon(to_canonical(xt, wpt), wt.reshape(9, Ci, Co), bt,
                            Ht, Wt, wpt, p_out=4)
    pc = maxpool2x2_canon(yc, wpt)
    got = from_canonical(pc, Ht // 2, Wt // 2, wpt // 2).astype(jnp.float32)

    ref = jax.lax.conv_general_dilated(
        xt.astype(jnp.float32), wt.astype(jnp.float32), (1, 1), 'SAME',
        dimension_numbers=('NHWC', 'HWIO', 'NHWC'))
    ref = jnp.maximum(ref + bt, 0.0)
    ref = ref.reshape(2, Ht // 2, 2, Wt // 2, 2, Co).max(axis=(2, 4))
    err = jnp.max(jnp.abs(got - ref))
    assert err < 0.05, float(err)


if __name__ == "__main__":
    _self_check()

    key = jax.random.PRNGKey(0)
    pkey, xkey = jax.random.split(key)

    in_spatial = 32                                  # 5 maxpools -> 1x1 final feature map
    params = init_params(pkey, _CFG, in_spatial, _FC_HIDDEN)
    x = jax.random.normal(xkey, (2, 3, in_spatial, in_spatial), jnp.float32)

    features, y = vgg16_modified_forward(params, x, _CFG)
    jax.block_until_ready((features, y))

    c_last = [v for v in _CFG if v != 'M'][-1]
    assert features.shape == (2, c_last, 1, 1), features.shape
    assert y.shape == (2, _FC_HIDDEN), y.shape
    assert features.dtype == jnp.float32 and y.dtype == jnp.float32
    print("KERNEL_OK")
</pallas_src>

<mosaic_0001>
module attributes {stable_mosaic.version = 11 : i64} {
  func.func @_conv3x3_kernel(%arg0: i32, %arg1: i32, %arg2: memref<1x192x8xbf16, #tpu.memory_space<vmem>>, %arg3: memref<9x8x16xbf16, #tpu.memory_space<vmem>>, %arg4: memref<1x16xf32, #tpu.memory_space<vmem>>, %arg5: memref<1x256x16xbf16, #tpu.memory_space<vmem>>) attributes {dimension_semantics = [#tpu.dimension_semantics<parallel>, #tpu.dimension_semantics<parallel>], iteration_bounds = array<i64: 1, 2>, scalar_prefetch = 0 : i64, scratch_operands = 0 : i64, tpu.core_type = #tpu.core_type<tc>, window_params = [{transform_indices = @transform_0, window_bounds = array<i64: 1, 192, 8>}, {transform_indices = @transform_1, window_bounds = array<i64: 9, 8, 16>}, {transform_indices = @transform_2, window_bounds = array<i64: 1, 16>}, {transform_indices = @transform_3, window_bounds = array<i64: 1, 256, 16>}]} {
    %cst = arith.constant 0.000000e+00 : bf16
    %0 = vector.broadcast %cst : bf16 to vector<64x16xbf16>
    %c0 = arith.constant 0 : index
    %c0_0 = arith.constant 0 : index
    %c0_1 = arith.constant 0 : index
    %1 = vector.load %arg5[%c0, %c0_0, %c0_1] : memref<1x256x16xbf16, #tpu.memory_space<vmem>>, vector<1x64x16xbf16>
    %2 = vector.shape_cast %1 : vector<1x64x16xbf16> to vector<64x16xbf16>
    %3 = vector.shape_cast %0 : vector<64x16xbf16> to vector<1x64x16xbf16>
    tpu.vector_store %arg5[%c0, %c0_0, %c0_1], %3 {strides = array<i32>} : memref<1x256x16xbf16, #tpu.memory_space<vmem>>, vector<1x64x16xbf16>,
    %c0_2 = arith.constant 0 : index
    %c192 = arith.constant 192 : index
    %c0_3 = arith.constant 0 : index
    %4 = vector.load %arg5[%c0_2, %c192, %c0_3] : memref<1x256x16xbf16, #tpu.memory_space<vmem>>, vector<1x64x16xbf16>
    %5 = vector.shape_cast %4 : vector<1x64x16xbf16> to vector<64x16xbf16>
    %6 = vector.shape_cast %0 : vector<64x16xbf16> to vector<1x64x16xbf16>
    tpu.vector_store %arg5[%c0_2, %c192, %c0_3], %6 {strides = array<i32>} : memref<1x256x16xbf16, #tpu.memory_space<vmem>>, vector<1x64x16xbf16>,
    %7 = tpu.iota {dimensions = array<i32: 0>} : vector<128x1xi32>
    %c16_i32 = arith.constant 16 : i32
    %c0_i32 = arith.constant 0 : i32
    %8 = arith.cmpi eq, %c16_i32, %c0_i32 : i32
    %c1_i32 = arith.constant 1 : i32
    %9 = arith.select %8, %c1_i32, %c16_i32 : i32
    %10 = vector.broadcast %9 : i32 to vector<128x1xi32>
    %11 = arith.remsi %7, %10 : vector<128x1xi32>
    %c0_i32_4 = arith.constant 0 : i32
    %12 = vector.broadcast %c0_i32_4 : i32 to vector<128x1xi32>
    %13 = arith.cmpi ne, %11, %12 : vector<128x1xi32>
    %c0_i32_5 = arith.constant 0 : i32
    %14 = vector.broadcast %c0_i32_5 : i32 to vector<128x1xi32>
    %15 = arith.cmpi slt, %11, %14 : vector<128x1xi32>
    %c0_i32_6 = arith.constant 0 : i32
    %16 = arith.cmpi slt, %9, %c0_i32_6 : i32
    %17 = vector.broadcast %16 : i1 to vector<128x1xi1>
    %18 = vector.broadcast %17 : vector<128x1xi1> to vector<128x1xi1>
    %19 = arith.xori %15, %18 : vector<128x1xi1>
    %20 = arith.andi %19, %13 : vector<128x1xi1>
    %21 = vector.broadcast %9 : i32 to vector<128x1xi32>
    %22 = arith.addi %11, %21 : vector<128x1xi32>
    %23 = arith.select %20, %22, %11 : vector<128x1xi1>, vector<128x1xi32>
    %c8_i32 = arith.constant 8 : i32
    %24 = vector.broadcast %c8_i32 : i32 to vector<128x1xi32>
    %25 = arith.cmpi slt, %23, %24 : vector<128x1xi32>
    %c0_7 = arith.constant 0 : index
    %c0_8 = arith.constant 0 : index
    %26 = vector.load %arg4[%c0_7, %c0_8] : memref<1x16xf32, #tpu.memory_space<vmem>>, vector<1x16xf32>
    %c0_9 = arith.constant 0 : index
    %c15 = arith.constant 15 : index
    %c0_10 = arith.constant 0 : index
    %27 = vector.load %arg2[%c0_9, %c15, %c0_10] : memref<1x192x8xbf16, #tpu.memory_space<vmem>>, vector<1x128x8xbf16>
    %28 = vector.shape_cast %27 : vector<1x128x8xbf16> to vector<128x8xbf16>
    %c0_11 = arith.constant 0 : index
    %c0_12 = arith.constant 0 : index
    %c0_13 = arith.constant 0 : index
    %29 = vector.load %arg3[%c0_11, %c0_12, %c0_13] : memref<9x8x16xbf16, #tpu.memory_space<vmem>>, vector<1x8x16xbf16>
    %30 = vector.shape_cast %29 : vector<1x8x16xbf16> to vector<8x16xbf16>
    %cst_14 = arith.constant dense<0.000000e+00> : vector<128x16xf32>
    %31 = tpu.matmul %28, %30, %cst_14 {dimension_numbers = #tpu.dot_dimension_numbers<[1], [0], [0], [1], [0, 0, 1, 1], [], []>} : vector<128x8xbf16>, vector<8x16xbf16>, vector<128x16xf32> -> vector<128x16xf32>
    %c0_15 = arith.constant 0 : index
    %c16 = arith.constant 16 : index
    %c0_16 = arith.constant 0 : index
    %32 = vector.load %arg2[%c0_15, %c16, %c0_16] : memref<1x192x8xbf16, #tpu.memory_space<vmem>>, vector<1x128x8xbf16>
    %33 = vector.shape_cast %32 : vector<1x128x8xbf16> to vector<128x8xbf16>
    %c1 = arith.constant 1 : index
    %c0_17 = arith.constant 0 : index
    %c0_18 = arith.constant 0 : index
    %34 = vector.load %arg3[%c1, %c0_17, %c0_18] : memref<9x8x16xbf16, #tpu.memory_space<vmem>>, vector<1x8x16xbf16>
    %35 = vector.shape_cast %34 : vector<1x8x16xbf16> to vector<8x16xbf16>
    %cst_19 = arith.constant dense<0.000000e+00> : vector<128x16xf32>
    %36 = tpu.matmul %33, %35, %cst_19 {dimension_numbers = #tpu.dot_dimension_numbers<[1], [0], [0], [1], [0, 0, 1, 1], [], []>} : vector<128x8xbf16>, vector<8x16xbf16>, vector<128x16xf32> -> vector<128x16xf32>
    %37 = arith.addf %31, %36 : vector<128x16xf32>
    %c0_20 = arith.constant 0 : index
    %c17 = arith.constant 17 : index
    %c0_21 = arith.constant 0 : index
    %38 = vector.load %arg2[%c0_20, %c17, %c0_21] : memref<1x192x8xbf16, #tpu.memory_space<vmem>>, vector<1x128x8xbf16>
    %39 = vector.shape_cast %38 : vector<1x128x8xbf16> to vector<128x8xbf16>
    %c2 = arith.constant 2 : index
    %c0_22 = arith.constant 0 : index
    %c0_23 = arith.constant 0 : index
    %40 = vector.load %arg3[%c2, %c0_22, %c0_23] : memref<9x8x16xbf16, #tpu.memory_space<vmem>>, vector<1x8x16xbf16>
    %41 = vector.shape_cast %40 : vector<1x8x16xbf16> to vector<8x16xbf16>
    %cst_24 = arith.constant dense<0.000000e+00> : vector<128x16xf32>
    %42 = tpu.matmul %39, %41, %cst_24 {dimension_numbers = #tpu.dot_dimension_numbers<[1], [0], [0], [1], [0, 0, 1, 1], [], []>} : vector<128x8xbf16>, vector<8x16xbf16>, vector<128x16xf32> -> vector<128x16xf32>
    %43 = arith.addf %37, %42 : vector<128x16xf32>
    %c0_25 = arith.constant 0 : index
    %c31 = arith.constant 31 : index
    %c0_26 = arith.constant 0 : index
    %44 = vector.load %arg2[%c0_25, %c31, %c0_26] : memref<1x192x8xbf16, #tpu.memory_space<vmem>>, vector<1x128x8xbf16>
    %45 = vector.shape_cast %44 : vector<1x128x8xbf16> to vector<128x8xbf16>
    %c3 = arith.constant 3 : index
    %c0_27 = arith.constant 0 : index
    %c0_28 = arith.constant 0 : index
    %46 = vector.load %arg3[%c3, %c0_27, %c0_28] : memref<9x8x16xbf16, #tpu.memory_space<vmem>>, vector<1x8x16xbf16>
    %47 = vector.shape_cast %46 : vector<1x8x16xbf16> to vector<8x16xbf16>
    %cst_29 = arith.constant dense<0.000000e+00> : vector<128x16xf32>
    %48 = tpu.matmul %45, %47, %cst_29 {dimension_numbers = #tpu.dot_dimension_numbers<[1], [0], [0], [1], [0, 0, 1, 1], [], []>} : vector<128x8xbf16>, vector<8x16xbf16>, vector<128x16xf32> -> vector<128x16xf32>
    %49 = arith.addf %43, %48 : vector<128x16xf32>
    %c0_30 = arith.constant 0 : index
    %c32 = arith.constant 32 : index
    %c0_31 = arith.constant 0 : index
    %50 = vector.load %arg2[%c0_30, %c32, %c0_31] : memref<1x192x8xbf16, #tpu.memory_space<vmem>>, vector<1x128x8xbf16>
    %51 = vector.shape_cast %50 : vector<1x128x8xbf16> to vector<128x8xbf16>
    %c4 = arith.constant 4 : index
    %c0_32 = arith.constant 0 : index
    %c0_33 = arith.constant 0 : index
    %52 = vector.load %arg3[%c4, %c0_32, %c0_33] : memref<9x8x16xbf16, #tpu.memory_space<vmem>>, vector<1x8x16xbf16>
    %53 = vector.shape_cast %52 : vector<1x8x16xbf16> to vector<8x16xbf16>
    %cst_34 = arith.constant dense<0.000000e+00> : vector<128x16xf32>
    %54 = tpu.matmul %51, %53, %cst_34 {dimension_numbers = #tpu.dot_dimension_numbers<[1], [0], [0], [1], [0, 0, 1, 1], [], []>} : vector<128x8xbf16>, vector<8x16xbf16>, vector<128x16xf32> -> vector<128x16xf32>
    %55 = arith.addf %49, %54 : vector<128x16xf32>
    %c0_35 = arith.constant 0 : index
    %c33 = arith.constant 33 : index
    %c0_36 = arith.constant 0 : index
    %56 = vector.load %arg2[%c0_35, %c33, %c0_36] : memref<1x192x8xbf16, #tpu.memory_space<vmem>>, vector<1x128x8xbf16>
    %57 = vector.shape_cast %56 : vector<1x128x8xbf16> to vector<128x8xbf16>
    %c5 = arith.constant 5 : index
    %c0_37 = arith.constant 0 : index
    %c0_38 = arith.constant 0 : index
    %58 = vector.load %arg3[%c5, %c0_37, %c0_38] : memref<9x8x16xbf16, #tpu.memory_space<vmem>>, vector<1x8x16xbf16>
    %59 = vector.shape_cast %58 : vector<1x8x16xbf16> to vector<8x16xbf16>
    %cst_39 = arith.constant dense<0.000000e+00> : vector<128x16xf32>
    %60 = tpu.matmul %57, %59, %cst_39 {dimension_numbers = #tpu.dot_dimension_numbers<[1], [0], [0], [1], [0, 0, 1, 1], [], []>} : vector<128x8xbf16>, vector<8x16xbf16>, vector<128x16xf32> -> vector<128x16xf32>
    %61 = arith.addf %55, %60 : vector<128x16xf32>
    %c0_40 = arith.constant 0 : index
    %c47 = arith.constant 47 : index
    %c0_41 = arith.constant 0 : index
    %62 = vector.load %arg2[%c0_40, %c47, %c0_41] : memref<1x192x8xbf16, #tpu.memory_space<vmem>>, vector<1x128x8xbf16>
    %63 = vector.shape_cast %62 : vector<1x128x8xbf16> to vector<128x8xbf16>
    %c6 = arith.constant 6 : index
    %c0_42 = arith.constant 0 : index
    %c0_43 = arith.constant 0 : index
    %64 = vector.load %arg3[%c6, %c0_42, %c0_43] : memref<9x8x16xbf16, #tpu.memory_space<vmem>>, vector<1x8x16xbf16>
    %65 = vector.shape_cast %64 : vector<1x8x16xbf16> to vector<8x16xbf16>
    %cst_44 = arith.constant dense<0.000000e+00> : vector<128x16xf32>
    %66 = tpu.matmul %63, %65, %cst_44 {dimension_numbers = #tpu.dot_dimension_numbers<[1], [0], [0], [1], [0, 0, 1, 1], [], []>} : vector<128x8xbf16>, vector<8x16xbf16>, vector<128x16xf32> -> vector<128x16xf32>
    %67 = arith.addf %61, %66 : vector<128x16xf32>
    %c0_45 = arith.constant 0 : index
    %c48 = arith.constant 48 : index
    %c0_46 = arith.constant 0 : index
    %68 = vector.load %arg2[%c0_45, %c48, %c0_46] : memref<1x192x8xbf16, #tpu.memory_space<vmem>>, vector<1x128x8xbf16>
    %69 = vector.shape_cast %68 : vector<1x128x8xbf16> to vector<128x8xbf16>
    %c7 = arith.constant 7 : index
    %c0_47 = arith.constant 0 : index
    %c0_48 = arith.constant 0 : index
    %70 = vector.load %arg3[%c7, %c0_47, %c0_48] : memref<9x8x16xbf16, #tpu.memory_space<vmem>>, vector<1x8x16xbf16>
    %71 = vector.shape_cast %70 : vector<1x8x16xbf16> to vector<8x16xbf16>
    %cst_49 = arith.constant dense<0.000000e+00> : vector<128x16xf32>
    %72 = tpu.matmul %69, %71, %cst_49 {dimension_numbers = #tpu.dot_dimension_numbers<[1], [0], [0], [1], [0, 0, 1, 1], [], []>} : vector<128x8xbf16>, vector<8x16xbf16>, vector<128x16xf32> -> vector<128x16xf32>
    %73 = arith.addf %67, %72 : vector<128x16xf32>
    %c0_50 = arith.constant 0 : index
    %c49 = arith.constant 49 : index
    %c0_51 = arith.constant 0 : index
    %74 = vector.load %arg2[%c0_50, %c49, %c0_51] : memref<1x192x8xbf16, #tpu.memory_space<vmem>>, vector<1x128x8xbf16>
    %75 = vector.shape_cast %74 : vector<1x128x8xbf16> to vector<128x8xbf16>
    %c8 = arith.constant 8 : index
    %c0_52 = arith.constant 0 : index
    %c0_53 = arith.constant 0 : index
    %76 = vector.load %arg3[%c8, %c0_52, %c0_53] : memref<9x8x16xbf16, #tpu.memory_space<vmem>>, vector<1x8x16xbf16>
    %77 = vector.shape_cast %76 : vector<1x8x16xbf16> to vector<8x16xbf16>
    %cst_54 = arith.constant dense<0.000000e+00> : vector<128x16xf32>
    %78 = tpu.matmul %75, %77, %cst_54 {dimension_numbers = #tpu.dot_dimension_numbers<[1], [0], [0], [1], [0, 0, 1, 1], [], []>} : vector<128x8xbf16>, vector<8x16xbf16>, vector<128x16xf32> -> vector<128x16xf32>
    %79 = arith.addf %73, %78 : vector<128x16xf32>
    %80 = vector.broadcast %26 : vector<1x16xf32> to vector<128x16xf32>
    %81 = arith.addf %79, %80 : vector<128x16xf32>
    %cst_55 = arith.constant 0.000000e+00 : f32
    %82 = vector.broadcast %cst_55 : f32 to vector<128x16xf32>
    %83 = arith.maximumf %81, %82 : vector<128x16xf32>
    %cst_56 = arith.constant 0.000000e+00 : f32
    %84 = vector.shape_cast %25 : vector<128x1xi1> to vector<128x1xi1>
    %85 = vector.broadcast %84 : vector<128x1xi1> to vector<128x16xi1>
    %86 = vector.broadcast %cst_56 : f32 to vector<128x16xf32>
    %87 = arith.select %85, %83, %86 : vector<128x16xi1>, vector<128x16xf32>
    %88 = arith.truncf %87 : vector<128x16xf32> to vector<128x16xbf16>
    %c0_57 = arith.constant 0 : index
    %c64 = arith.constant 64 : index
    %c0_58 = arith.constant 0 : index
    %89 = vector.load %arg5[%c0_57, %c64, %c0_58] : memref<1x256x16xbf16, #tpu.memory_space<vmem>>, vector<1x128x16xbf16>
    %90 = vector.shape_cast %89 : vector<1x128x16xbf16> to vector<128x16xbf16>
    %91 = vector.shape_cast %88 : vector<128x16xbf16> to vector<1x128x16xbf16>
    tpu.vector_store %arg5[%c0_57, %c64, %c0_58], %91 {strides = array<i32>} : memref<1x256x16xbf16, #tpu.memory_space<vmem>>, vector<1x128x16xbf16>,
    return
  }
  func.func @transform_0(%arg0: i32, %arg1: i32) -> (i32, i32, i32) {
    %c0_i32 = arith.constant 0 : i32
    %c0_i32_0 = arith.constant 0 : i32
    %c0_i32_1 = arith.constant 0 : i32
    return %arg1, %c0_i32, %c0_i32_0 : i32, i32, i32
  }
  func.func @transform_1(%arg0: i32, %arg1: i32) -> (i32, i32, i32) {
    %c0_i32 = arith.constant 0 : i32
    %c0_i32_0 = arith.constant 0 : i32
    %c0_i32_1 = arith.constant 0 : i32
    return %c0_i32, %c0_i32_0, %arg0 : i32, i32, i32
  }
  func.func @transform_2(%arg0: i32, %arg1: i32) -> (i32, i32) {
    %c0_i32 = arith.constant 0 : i32
    %c0_i32_0 = arith.constant 0 : i32
    return %c0_i32, %arg0 : i32, i32
  }
  func.func @transform_3(%arg0: i32, %arg1: i32) -> (i32, i32, i32) {
    %c0_i32 = arith.constant 0 : i32
    %c0_i32_0 = arith.constant 0 : i32
    return %arg1, %c0_i32, %arg0 : i32, i32, i32
  }
}

</mosaic_0001>

<llo_original>
// kernel: tpu_custom_call.1
$region0: #{tpu_custom_call.1}
  #allocation0 [shape = 'u32[]', space=smem, size = 0x4, offset = 0x4, fixed_abs, tag = 'smem constant byte address 0x4 - core index']
  #allocation1 [shape = 'u32[144,128]{1,0:T(1,128)}', space=vmem, size = 0x12000, scoped, tag = 'internal scratch']
  %s0 = inlined_call_operand.vmem [shape: bf16[2,192,8], index: 0, kind: input, shape index: {}]
  %s1 = inlined_call_operand.vmem [shape: bf16[9,8,16], index: 1, kind: input, shape index: {}]
  %s2 = inlined_call_operand.vmem [shape: f32[1,16], index: 2, kind: input, shape index: {}]
  %s3 = inlined_call_operand.vmem [shape: bf16[2,256,16], index: 3, kind: output, shape index: {}]
  %s4 = sld [smem:[#allocation0]]
  $region45: #{tpu_custom_call.1} parent=0
    _
  %s6 = ssub.s32 1, %s4
  %s7 = scalar_select 0, %s6, %s4
  loop: start=0, step=1, limit=4
  $region2: #{tpu_custom_call.1} parent=0 // loop_pre_header
    _
  $region3: #{tpu_custom_call.1} parent=0 // loop_header
    %s9 = sphi 0, %s13
    %p10 = scmp.ge.s32.totalorder %s9, 4
    %s16 = sphi 0, %s28
    %s17 = sphi 0, %s24
    %s18 = sphi 0, %s16
    %s19 = sphi 0, %s17
    %s20 = sphi 0, %s18
    %s21 = sphi 0, %s19
    %s31 = sphi 0, %s33
    %s34 = sphi 0, %s31
    %s35 = sphi 0, %s34
    %s51 = sphi 0, %s35
    %s57 = sphi 0, %s59
    %s60 = sphi 0, %s57
    %s61 = sphi 0, %s60
    %s77 = sphi 0, %s61
    %s83 = sphi 0, %s85
    %s86 = sphi 0, %s83
    %s87 = sphi 0, %s86
    %s103 = sphi 0, %s87
    %s111 = sphi 0, %s113
    %s114 = sphi 0, %s111
    %s115 = sphi 0, %s114
    %s131 = sphi 0, %s115
  $region4: #{tpu_custom_call.1} parent=0 // loop_header_branch
    %12 = sbr.rel (%p10) target = $region8
  $region5: #{tpu_custom_call.1} parent=0 // loop_body
    %s14 = ssub.s32 %s9, 1
    %s15 = ssub.s32 %s9, 2
    %s22 = sadd.s32 1, %s17
    %p23 = scmp.ge.s32.totalorder %s22, 2
    %s24 = scalar_select %p23, 0, %s22
    %s25 = sadd.s32 1, %s16
    %s26 = scalar_select %p23, %s25, %s16
    %p27 = scmp.ge.s32.totalorder %s26, 1
    %s28 = scalar_select %p27, 0, %s26
    %s29 = ssub.s32 %s17, %s24
    %p30 = scmp.eq.s32.totalorder %s29, 0
    %s32 = sadd.s32 %s31, 1
    %s33 = scalar_select %p30, %s31, %s32
    %p36 = pneg %p30
    %p37 = scmp.eq.s32.totalorder %s9, 1
    %p38 = por %p36, %p37
    %p39 = scmp.ne.s32.totalorder %s31, %s34
    %p40 = scmp.eq.s32.totalorder %s9, 0
    %p41 = por %p39, %p40
    %p42 = scmp.ne.s32.totalorder %s31, %s34
    %p43 = scmp.eq.s32.totalorder %s14, 1
    %p44 = por %p42, %p43
    %p45 = scmp.ne.s32.totalorder %s34, %s35
    %p46 = scmp.eq.s32.totalorder %s14, 0
    %p47 = por %p45, %p46
    %p48 = scmp.ne.s32.totalorder %s34, %s35
    %p49 = scmp.eq.s32.totalorder %s15, 1
    %p50 = por %p48, %p49
    %p52 = scmp.ne.s32.totalorder %s35, %s51
    %p53 = scmp.eq.s32.totalorder %s15, 0
    %p54 = por %p52, %p53
    %s55 = ssub.s32 %s16, %s28
    %p56 = scmp.eq.s32.totalorder %s55, 0
    %s58 = sadd.s32 %s57, 1
    %s59 = scalar_select %p56, %s57, %s58
    %p62 = pneg %p56
    %p63 = scmp.eq.s32.totalorder %s9, 1
    %p64 = por %p62, %p63
    %p65 = scmp.ne.s32.totalorder %s57, %s60
    %p66 = scmp.eq.s32.totalorder %s9, 0
    %p67 = por %p65, %p66
    %p68 = scmp.ne.s32.totalorder %s57, %s60
    %p69 = scmp.eq.s32.totalorder %s14, 1
    %p70 = por %p68, %p69
    %p71 = scmp.ne.s32.totalorder %s60, %s61
    %p72 = scmp.eq.s32.totalorder %s14, 0
    %p73 = por %p71, %p72
    %p74 = scmp.ne.s32.totalorder %s60, %s61
    %p75 = scmp.eq.s32.totalorder %s15, 1
    %p76 = por %p74, %p75
    %p78 = scmp.ne.s32.totalorder %s61, %s77
    %p79 = scmp.eq.s32.totalorder %s15, 0
    %p80 = por %p78, %p79
    %s81 = ssub.s32 %s16, %s28
    %p82 = scmp.eq.s32.totalorder %s81, 0
    %s84 = sadd.s32 %s83, 1
    %s85 = scalar_select %p82, %s83, %s84
    %p88 = pneg %p82
    %p89 = scmp.eq.s32.totalorder %s9, 1
    %p90 = por %p88, %p89
    %p91 = scmp.ne.s32.totalorder %s83, %s86
    %p92 = scmp.eq.s32.totalorder %s9, 0
    %p93 = por %p91, %p92
    %p94 = scmp.ne.s32.totalorder %s83, %s86
    %p95 = scmp.eq.s32.totalorder %s14, 1
    %p96 = por %p94, %p95
    %p97 = scmp.ne.s32.totalorder %s86, %s87
    %p98 = scmp.eq.s32.totalorder %s14, 0
    %p99 = por %p97, %p98
    %p100 = scmp.ne.s32.totalorder %s86, %s87
    %p101 = scmp.eq.s32.totalorder %s15, 1
    %p102 = por %p100, %p101
    %p104 = scmp.ne.s32.totalorder %s87, %s103
    %p105 = scmp.eq.s32.totalorder %s15, 0
    %p106 = por %p104, %p105
    %s107 = ssub.s32 %s17, %s24
    %s108 = ssub.s32 %s16, %s28
    %s109 = sor.u32 %s107, %s108
    %p110 = scmp.eq.s32.totalorder %s109, 0
    %s112 = sadd.s32 %s111, 1
    %s113 = scalar_select %p110, %s111, %s112
    %p116 = pneg %p110
    %p117 = scmp.eq.s32.totalorder %s9, 1
    %p118 = por %p116, %p117
    %p119 = scmp.ne.s32.totalorder %s111, %s114
    %p120 = scmp.eq.s32.totalorder %s9, 0
    %p121 = por %p119, %p120
    %p122 = scmp.ne.s32.totalorder %s111, %s114
    %p123 = scmp.eq.s32.totalorder %s14, 1
    %p124 = por %p122, %p123
    %p125 = scmp.ne.s32.totalorder %s114, %s115
    %p126 = scmp.eq.s32.totalorder %s14, 0
    %p127 = por %p125, %p126
    %p128 = scmp.ne.s32.totalorder %s114, %s115
    %p129 = scmp.eq.s32.totalorder %s15, 1
    %p130 = por %p128, %p129
    %p132 = scmp.ne.s32.totalorder %s115, %s131
    %p133 = scmp.eq.s32.totalorder %s15, 0
    %p134 = por %p132, %p133
    %p135 = scmp.le.s32.totalorder 1, %s9
    %p136 = scmp.lt.s32.totalorder %s9, 3
    %p137 = pnand %p135, %p136
    %p138 = pneg %p137
    // Predicated region
    $region9: #{tpu_custom_call.1} parent=5 // pred_check
      _
    $region10: #{tpu_custom_call.1} parent=5 // pred_check_branch
      %140 = sbr.rel (%p137) target = $region12
    $region11: #{tpu_custom_call.1} parent=5 // pred_region
      %s141 = ssub.s32 %s9, 1
      // Predicated region
      $region13: #{tpu_custom_call.1} parent=11 // pred_check
        %p142 = pneg %p73
      $region14: #{tpu_custom_call.1} parent=11 // pred_check_branch
        %144 = sbr.rel (%p142) target = $region16
      $region15: #{tpu_custom_call.1} parent=11 // pred_region
        %p145 = scmp.lt.s32.totalorder %s18, 0
        %s146 = scalar_select %p145, %s18, 0
        %s147 = smul.addr %s146, 4
        %s148 = scalar_lea.vmem %s1, %s147
      $region16: #{tpu_custom_call.1} parent=11 // pred_fallthru
        _
      // Predicated region
      $region17: #{tpu_custom_call.1} parent=11 // pred_check
        %p149 = pneg %p99
      $region18: #{tpu_custom_call.1} parent=11 // pred_check_branch
        %151 = sbr.rel (%p149) target = $region20
      $region19: #{tpu_custom_call.1} parent=11 // pred_region
        %p152 = scmp.lt.s32.totalorder %s18, 0
        %s153 = scalar_select %p152, %s18, 0
        %s154 = scalar_lea.vmem %s2, %s153
      $region20: #{tpu_custom_call.1} parent=11 // pred_fallthru
        _
    $region12: #{tpu_custom_call.1} parent=5 // pred_fallthru
      _
    %p155 = scmp.lt.s32.totalorder %s9, 2
    // Predicated region
    $region21: #{tpu_custom_call.1} parent=5 // pred_check
      %p156 = pneg %p155
    $region22: #{tpu_custom_call.1} parent=5 // pred_check_branch
      %158 = sbr.rel (%p156) target = $region24
    $region23: #{tpu_custom_call.1} parent=5 // pred_region
      // Predicated region
      $region25: #{tpu_custom_call.1} parent=23 // pred_check
        %p159 = pneg %p41
      $region26: #{tpu_custom_call.1} parent=23 // pred_check_branch
        %161 = sbr.rel (%p159) target = $region28
      $region27: #{tpu_custom_call.1} parent=23 // pred_region
        %p162 = scmp.lt.s32.totalorder %s17, 1
        %s163 = scalar_select %p162, %s17, 1
        %s164 = smul.addr %s163, 24
        %s165 = smul.addr %s164, 4
        %s166 = scalar_lea.vmem %s0, %s165
      $region28: #{tpu_custom_call.1} parent=23 // pred_fallthru
        _
    $region24: #{tpu_custom_call.1} parent=5 // pred_fallthru
      _
    %p167 = scmp.le.s32.totalorder 1, %s9
    %p168 = scmp.lt.s32.totalorder %s9, 3
    %p169 = pnand %p167, %p168
    %p170 = pneg %p169
    // Predicated region
    $region29: #{tpu_custom_call.1} parent=5 // pred_check
      _
    $region30: #{tpu_custom_call.1} parent=5 // pred_check_branch
      %172 = sbr.rel (%p169) target = $region32
    $region31: #{tpu_custom_call.1} parent=5 // pred_region
      %s173 = ssub.s32 %s9, 1
      %p174 = scmp.lt.s32.totalorder %s19, 1
      %s175 = scalar_select %p174, %s19, 1
      %s176 = smul.addr %s175, 24
      %s177 = smul.addr %s176, 4
      %s178 = scalar_lea.vmem %s0, %s177
      %p179 = pneg %p47
      %p180 = pneg %p44
      %p181 = scmp.lt.s32.totalorder %s18, 0
      %s182 = scalar_select %p181, %s18, 0
      %s183 = smul.addr %s182, 4
      %s184 = scalar_lea.vmem %s1, %s183
      %p185 = pneg %p73
      %p186 = pneg %p70
      %p187 = scmp.lt.s32.totalorder %s18, 0
      %s188 = scalar_select %p187, %s18, 0
      %s189 = scalar_lea.vmem %s2, %s188
      %p190 = pneg %p99
      %p191 = pneg %p96
      %p192 = pneg %p127
      %p193 = pneg %p124
      %p194 = scmp.lt.s32.totalorder %s19, 1
      %s195 = scalar_select %p194, %s19, 1
      %p196 = scmp.lt.s32.totalorder %s18, 0
      %s197 = scalar_select %p196, %s18, 0
      %s198 = smul.addr %s195, 32
      %s199 = sadd.s32 %s197, %s198
      %s200 = smul.addr %s199, 4
      %s201 = scalar_lea.vmem %s3, %s200
      %p202 = scmp.lt.s32.totalorder %s19, 1
      %s203 = scalar_select %p202, %s19, 1
      %s204 = smul.addr %s203, 24
      %s205 = smul.addr %s204, 4
      %s206 = scalar_lea.vmem %s0, %s205
      %p207 = scmp.lt.s32.totalorder %s18, 0
      %s208 = scalar_select %p207, %s18, 0
      %s209 = smul.addr %s208, 4
      %s210 = scalar_lea.vmem %s1, %s209
      %p211 = scmp.lt.s32.totalorder %s18, 0
      %s212 = scalar_select %p211, %s18, 0
      %s213 = scalar_lea.vmem %s2, %s212
      %p214 = scmp.lt.s32.totalorder %s19, 1
      %s215 = scalar_select %p214, %s19, 1
      %p216 = scmp.lt.s32.totalorder %s18, 0
      %s217 = scalar_select %p216, %s18, 0
      %s218 = smul.addr %s215, 32
      %s219 = sadd.s32 %s217, %s218
      %s220 = smul.addr %s219, 4
      %s221 = scalar_lea.vmem %s3, %s220
      %vm223 = vcmask 125952
      %224 = vst.msk [vmem:[%s221] sm:$0xf] %vm223, 0
      %225 = vst.msk [vmem:[%s221 + $0x4] sm:$0xf] %vm223, 0
      %226 = vst.msk [vmem:[%s221 + $0x8] sm:$0xf] %vm223, 0
      %227 = vst.msk [vmem:[%s221 + $0xc] sm:$0xf] %vm223, 0
      %228 = vst.msk [vmem:[%s221 + $0x10] sm:$0xf] %vm223, 0
      %229 = vst.msk [vmem:[%s221 + $0x14] sm:$0xf] %vm223, 0
      %230 = vst.msk [vmem:[%s221 + $0x18] sm:$0xf] %vm223, 0
      %231 = vst.msk [vmem:[%s221 + $0x1c] sm:$0xf] %vm223, 0
      %232 = vst.msk [vmem:[%s221 + $0x60] sm:$0xf] %vm223, 0
      %233 = vst.msk [vmem:[%s221 + $0x64] sm:$0xf] %vm223, 0
      %234 = vst.msk [vmem:[%s221 + $0x68] sm:$0xf] %vm223, 0
      %235 = vst.msk [vmem:[%s221 + $0x6c] sm:$0xf] %vm223, 0
      %236 = vst.msk [vmem:[%s221 + $0x70] sm:$0xf] %vm223, 0
      %237 = vst.msk [vmem:[%s221 + $0x74] sm:$0xf] %vm223, 0
      %238 = vst.msk [vmem:[%s221 + $0x78] sm:$0xf] %vm223, 0
      %239 = vst.msk [vmem:[%s221 + $0x7c] sm:$0xf] %vm223, 0
      %v240 = vlaneseq
      %v241 = vshrl.u32 %v240, 7
      %v242 = vadd.s32 %v241, 8
      %v243 = vadd.s32 %v241, 16
      %v244 = vadd.s32 %v241, 24
      %v245 = vadd.s32 %v241, 32
      %v246 = vadd.s32 %v241, 40
      %v247 = vadd.s32 %v241, 48
      %v248 = vadd.s32 %v241, 56
      %v249 = vadd.s32 %v241, 64
      %v250 = vadd.s32 %v241, 72
      %v251 = vadd.s32 %v241, 80
      %v252 = vadd.s32 %v241, 88
      %v253 = vadd.s32 %v241, 96
      %v254 = vadd.s32 %v241, 104
      %v255 = vadd.s32 %v241, 112
      %v256 = vadd.s32 %v241, 120
      %vm257 = vcmp.lt.s32.totalorder %v241, 0
      %v258 = vsub.s32 0, %v241
      %v259 = vsel %vm257, %v258, %v241
      %v260 = vshrl.u32 %v259, 4
      %v261 = vand.u32 %v259, 15
      %v262 = vsub.s32 0, %v261
      %v263 = vsel %vm257, %v262, %v261
      %vm264 = vcmp.lt.s32.totalorder %v242, 0
      %v265 = vsub.s32 0, %v242
      %v266 = vsel %vm264, %v265, %v242
      %v267 = vshrl.u32 %v266, 4
      %v268 = vand.u32 %v266, 15
      %v269 = vsub.s32 0, %v268
      %v270 = vsel %vm264, %v269, %v268
      %vm271 = vcmp.lt.s32.totalorder %v243, 0
      %v272 = vsub.s32 0, %v243
      %v273 = vsel %vm271, %v272, %v243
      %v274 = vshrl.u32 %v273, 4
      %v275 = vand.u32 %v273, 15
      %v276 = vsub.s32 0, %v275
      %v277 = vsel %vm271, %v276, %v275
      %vm278 = vcmp.lt.s32.totalorder %v244, 0
      %v279 = vsub.s32 0, %v244
      %v280 = vsel %vm278, %v279, %v244
      %v281 = vshrl.u32 %v280, 4
      %v282 = vand.u32 %v280, 15
      %v283 = vsub.s32 0, %v282
      %v284 = vsel %vm278, %v283, %v282
      %vm285 = vcmp.lt.s32.totalorder %v245, 0
      %v286 = vsub.s32 0, %v245
      %v287 = vsel %vm285, %v286, %v245
      %v288 = vshrl.u32 %v287, 4
      %v289 = vand.u32 %v287, 15
      %v290 = vsub.s32 0, %v289
      %v291 = vsel %vm285, %v290, %v289
      %vm292 = vcmp.lt.s32.totalorder %v246, 0
      %v293 = vsub.s32 0, %v246
      %v294 = vsel %vm292, %v293, %v246
      %v295 = vshrl.u32 %v294, 4
      %v296 = vand.u32 %v294, 15
      %v297 = vsub.s32 0, %v296
      %v298 = vsel %vm292, %v297, %v296
      %vm299 = vcmp.lt.s32.totalorder %v247, 0
      %v300 = vsub.s32 0, %v247
      %v301 = vsel %vm299, %v300, %v247
      %v302 = vshrl.u32 %v301, 4
      %v303 = vand.u32 %v301, 15
      %v304 = vsub.s32 0, %v303
      %v305 = vsel %vm299, %v304, %v303
      %vm306 = vcmp.lt.s32.totalorder %v248, 0
      %v307 = vsub.s32 0, %v248
      %v308 = vsel %vm306, %v307, %v248
      %v309 = vshrl.u32 %v308, 4
      %v310 = vand.u32 %v308, 15
      %v311 = vsub.s32 0, %v310
      %v312 = vsel %vm306, %v311, %v310
      %vm313 = vcmp.lt.s32.totalorder %v249, 0
      %v314 = vsub.s32 0, %v249
      %v315 = vsel %vm313, %v314, %v249
      %v316 = vshrl.u32 %v315, 4
      %v317 = vand.u32 %v315, 15
      %v318 = vsub.s32 0, %v317
      %v319 = vsel %vm313, %v318, %v317
      %vm320 = vcmp.lt.s32.totalorder %v250, 0
      %v321 = vsub.s32 0, %v250
      %v322 = vsel %vm320, %v321, %v250
      %v323 = vshrl.u32 %v322, 4
      %v324 = vand.u32 %v322, 15
      %v325 = vsub.s32 0, %v324
      %v326 = vsel %vm320, %v325, %v324
      %vm327 = vcmp.lt.s32.totalorder %v251, 0
      %v328 = vsub.s32 0, %v251
      %v329 = vsel %vm327, %v328, %v251
      %v330 = vshrl.u32 %v329, 4
      %v331 = vand.u32 %v329, 15
      %v332 = vsub.s32 0, %v331
      %v333 = vsel %vm327, %v332, %v331
      %vm334 = vcmp.lt.s32.totalorder %v252, 0
      %v335 = vsub.s32 0, %v252
      %v336 = vsel %vm334, %v335, %v252
      %v337 = vshrl.u32 %v336, 4
      %v338 = vand.u32 %v336, 15
      %v339 = vsub.s32 0, %v338
      %v340 = vsel %vm334, %v339, %v338
      %vm341 = vcmp.lt.s32.totalorder %v253, 0
      %v342 = vsub.s32 0, %v253
      %v343 = vsel %vm341, %v342, %v253
      %v344 = vshrl.u32 %v343, 4
      %v345 = vand.u32 %v343, 15
      %v346 = vsub.s32 0, %v345
      %v347 = vsel %vm341, %v346, %v345
      %vm348 = vcmp.lt.s32.totalorder %v254, 0
      %v349 = vsub.s32 0, %v254
      %v350 = vsel %vm348, %v349, %v254
      %v351 = vshrl.u32 %v350, 4
      %v352 = vand.u32 %v350, 15
      %v353 = vsub.s32 0, %v352
      %v354 = vsel %vm348, %v353, %v352
      %vm355 = vcmp.lt.s32.totalorder %v255, 0
      %v356 = vsub.s32 0, %v255
      %v357 = vsel %vm355, %v356, %v255
      %v358 = vshrl.u32 %v357, 4
      %v359 = vand.u32 %v357, 15
      %v360 = vsub.s32 0, %v359
      %v361 = vsel %vm355, %v360, %v359
      %vm362 = vcmp.lt.s32.totalorder %v256, 0
      %v363 = vsub.s32 0, %v256
      %v364 = vsel %vm362, %v363, %v256
      %v365 = vshrl.u32 %v364, 4
      %v366 = vand.u32 %v364, 15
      %v367 = vsub.s32 0, %v366
      %v368 = vsel %vm362, %v367, %v366
      %vm369 = vcmp.ne.s32.totalorder %v263, 0
      %vm370 = vcmp.ne.s32.totalorder %v270, 0
      %vm371 = vcmp.ne.s32.totalorder %v277, 0
      %vm372 = vcmp.ne.s32.totalorder %v284, 0
      %vm373 = vcmp.ne.s32.totalorder %v291, 0
      %vm374 = vcmp.ne.s32.totalorder %v298, 0
      %vm375 = vcmp.ne.s32.totalorder %v305, 0
      %vm376 = vcmp.ne.s32.totalorder %v312, 0
      %vm377 = vcmp.ne.s32.totalorder %v319, 0
      %vm378 = vcmp.ne.s32.totalorder %v326, 0
      %vm379 = vcmp.ne.s32.totalorder %v333, 0
      %vm380 = vcmp.ne.s32.totalorder %v340, 0
      %vm381 = vcmp.ne.s32.totalorder %v347, 0
      %vm382 = vcmp.ne.s32.totalorder %v354, 0
      %vm383 = vcmp.ne.s32.totalorder %v361, 0
      %vm384 = vcmp.ne.s32.totalorder %v368, 0
      %vm385 = vcmp.lt.s32.totalorder %v263, 0
      %vm386 = vcmp.lt.s32.totalorder %v270, 0
      %vm387 = vcmp.lt.s32.totalorder %v277, 0
      %vm388 = vcmp.lt.s32.totalorder %v284, 0
      %vm389 = vcmp.lt.s32.totalorder %v291, 0
      %vm390 = vcmp.lt.s32.totalorder %v298, 0
      %vm391 = vcmp.lt.s32.totalorder %v305, 0
      %vm392 = vcmp.lt.s32.totalorder %v312, 0
      %vm393 = vcmp.lt.s32.totalorder %v319, 0
      %vm394 = vcmp.lt.s32.totalorder %v326, 0
      %vm395 = vcmp.lt.s32.totalorder %v333, 0
      %vm396 = vcmp.lt.s32.totalorder %v340, 0
      %vm397 = vcmp.lt.s32.totalorder %v347, 0
      %vm398 = vcmp.lt.s32.totalorder %v354, 0
      %vm399 = vcmp.lt.s32.totalorder %v361, 0
      %vm400 = vcmp.lt.s32.totalorder %v368, 0
      %vm401 = vmand %vm385, %vm369
      %vm402 = vmand %vm386, %vm370
      %vm403 = vmand %vm387, %vm371
      %vm404 = vmand %vm388, %vm372
      %vm405 = vmand %vm389, %vm373
      %vm406 = vmand %vm390, %vm374
      %vm407 = vmand %vm391, %vm375
      %vm408 = vmand %vm392, %vm376
      %vm409 = vmand %vm393, %vm377
      %vm410 = vmand %vm394, %vm378
      %vm411 = vmand %vm395, %vm379
      %vm412 = vmand %vm396, %vm380
      %vm413 = vmand %vm397, %vm381
      %vm414 = vmand %vm398, %vm382
      %vm415 = vmand %vm399, %vm383
      %vm416 = vmand %vm400, %vm384
      %v417 = vadd.s32 %v263, 16
      %v418 = vadd.s32 %v270, 16
      %v419 = vadd.s32 %v277, 16
      %v420 = vadd.s32 %v284, 16
      %v421 = vadd.s32 %v291, 16
      %v422 = vadd.s32 %v298, 16
      %v423 = vadd.s32 %v305, 16
      %v424 = vadd.s32 %v312, 16
      %v425 = vadd.s32 %v319, 16
      %v426 = vadd.s32 %v326, 16
      %v427 = vadd.s32 %v333, 16
      %v428 = vadd.s32 %v340, 16
      %v429 = vadd.s32 %v347, 16
      %v430 = vadd.s32 %v354, 16
      %v431 = vadd.s32 %v361, 16
      %v432 = vadd.s32 %v368, 16
      %v433 = vsel %vm401, %v417, %v263
      %v434 = vsel %vm402, %v418, %v270
      %v435 = vsel %vm403, %v419, %v277
      %v436 = vsel %vm404, %v420, %v284
      %v437 = vsel %vm405, %v421, %v291
      %v438 = vsel %vm406, %v422, %v298
      %v439 = vsel %vm407, %v423, %v305
      %v440 = vsel %vm408, %v424, %v312
      %v441 = vsel %vm409, %v425, %v319
      %v442 = vsel %vm410, %v426, %v326
      %v443 = vsel %vm411, %v427, %v333
      %v444 = vsel %vm412, %v428, %v340
      %v445 = vsel %vm413, %v429, %v347
      %v446 = vsel %vm414, %v430, %v354
      %v447 = vsel %vm415, %v431, %v361
      %v448 = vsel %vm416, %v432, %v368
      %vm449 = vcmp.lt.s32.totalorder %v433, 8
      %vm450 = vcmp.lt.s32.totalorder %v434, 8
      %vm451 = vcmp.lt.s32.totalorder %v435, 8
      %vm452 = vcmp.lt.s32.totalorder %v436, 8
      %vm453 = vcmp.lt.s32.totalorder %v437, 8
      %vm454 = vcmp.lt.s32.totalorder %v438, 8
      %vm455 = vcmp.lt.s32.totalorder %v439, 8
      %vm456 = vcmp.lt.s32.totalorder %v440, 8
      %vm457 = vcmp.lt.s32.totalorder %v441, 8
      %vm458 = vcmp.lt.s32.totalorder %v442, 8
      %vm459 = vcmp.lt.s32.totalorder %v443, 8
      %vm460 = vcmp.lt.s32.totalorder %v444, 8
      %vm461 = vcmp.lt.s32.totalorder %v445, 8
      %vm462 = vcmp.lt.s32.totalorder %v446, 8
      %vm463 = vcmp.lt.s32.totalorder %v447, 8
      %vm464 = vcmp.lt.s32.totalorder %v448, 8
      %v465 = vld [vmem:[%s213] sm:$0x1]
      %v466 = vld [vmem:[%s206 + $0x4] sm:$0x8]
      %v467 = vld [vmem:[%s206 + $0x8] sm:$0xf]
      %v468 = vld [vmem:[%s206 + $0xc] sm:$0xf]
      %v469 = vld [vmem:[%s206 + $0x10] sm:$0xf]
      %v470 = vld [vmem:[%s206 + $0x14] sm:$0xf]
      %v471 = vld [vmem:[%s206 + $0x18] sm:$0xf]
      %v472 = vld [vmem:[%s206 + $0x1c] sm:$0xf]
      %v473 = vld [vmem:[%s206 + $0x20] sm:$0xf]
      %v474 = vld [vmem:[%s206 + $0x24] sm:$0xf]
      %v475 = vld [vmem:[%s206 + $0x28] sm:$0xf]
      %v476 = vld [vmem:[%s206 + $0x2c] sm:$0xf]
      %v477 = vld [vmem:[%s206 + $0x30] sm:$0xf]
      %v478 = vld [vmem:[%s206 + $0x34] sm:$0xf]
      %v479 = vld [vmem:[%s206 + $0x38] sm:$0xf]
      %v480 = vld [vmem:[%s206 + $0x3c] sm:$0xf]
      %v481 = vld [vmem:[%s206 + $0x40] sm:$0xf]
      %v482 = vld [vmem:[%s206 + $0x44] sm:$0xf]
      %v483 = vld [vmem:[%s210] sm:$0xf]
      %s484 = scalar_lea.vmem %s210, 4
      %v485 = vld [vmem:[%s484] sm:$0xf]
      %v502 = vunpack.c.l.b16 %v467
      %v503 = vunpack.c.l.b16 %v468
      %v504 = vunpack.c.l.b16 %v469
      %v505 = vunpack.c.l.b16 %v470
      %v506 = vunpack.c.l.b16 %v471
      %v507 = vunpack.c.l.b16 %v472
      %v508 = vunpack.c.l.b16 %v473
      %v509 = vunpack.c.l.b16 %v474
      %v510 = vunpack.c.l.b16 %v475
      %v511 = vunpack.c.l.b16 %v476
      %v512 = vunpack.c.l.b16 %v477
      %v513 = vunpack.c.l.b16 %v478
      %v514 = vunpack.c.l.b16 %v479
      %v515 = vunpack.c.l.b16 %v480
      %v516 = vunpack.c.l.b16 %v481
      %v517 = vunpack.c.l.b16 %v482
      %v518 = vpack.c.b16 %v503, %v502
      %v519 = vpack.c.b16 %v505, %v504
      %v520 = vpack.c.b16 %v507, %v506
      %v521 = vpack.c.b16 %v509, %v508
      %v522 = vpack.c.b16 %v511, %v510
      %v523 = vpack.c.b16 %v513, %v512
      %v524 = vpack.c.b16 %v515, %v514
      %v525 = vpack.c.b16 %v517, %v516
      %vm526 = vcmask 64512
      %v528 = vsel %vm526, %v518, 0
      %v531 = vsel %vm526, %v519, 0
      %v534 = vsel %vm526, %v520, 0
      %v537 = vsel %vm526, %v521, 0
      %v540 = vsel %vm526, %v522, 0
      %v543 = vsel %vm526, %v523, 0
      %v546 = vsel %vm526, %v524, 0
      %v549 = vsel %vm526, %v525, 0
      %vm551 = vcmask 1043456
      %v553 = vsel %vm551, %v485, 0
      %555 = vmatprep.subr.bf16.mxu0 0
      %556 = vmatpush1.bf16.msra.mxu0 %v553
      %557 = vmatprep.subr.bf16.mxu0 0
      %558 = vmatpush1.bf16.msra.mxu0 0
      %559 = vmatprep.subr.bf16.mxu0 0
      %560 = vmatpush1.bf16.msra.mxu0 0
      %561 = vmatprep.subr.bf16.mxu0 0
      %562 = vmatpush1.bf16.msra.mxu0 0
      %563 = vmatprep.subr.bf16.mxu0 0
      %564 = vmatpush1.bf16.msra.mxu0 0
      %565 = vmatprep.subr.bf16.mxu0 0
      %566 = vmatpush1.bf16.msra.mxu0 0
      %567 = vmatprep.subr.bf16.mxu0 0
      %568 = vmatpush1.bf16.msra.mxu0 0
      %569 = vmatprep.subr.bf16.mxu0 0
      %570 = vmatpush1.bf16.msra.mxu0 0
      %571 = vmatprep.subr.bf16.mxu0 0
      %572 = vmatpush1.bf16.msra.mxu0 0
      %573 = vmatprep.subr.bf16.mxu0 0
      %574 = vmatpush1.bf16.msra.mxu0 0
      %575 = vmatprep.subr.bf16.mxu0 0
      %576 = vmatpush1.bf16.msra.mxu0 0
      %577 = vmatprep.subr.bf16.mxu0 0
      %578 = vmatpush1.bf16.msra.mxu0 0
      %579 = vmatprep.subr.bf16.mxu0 0
      %580 = vmatpush1.bf16.msra.mxu0 0
      %581 = vmatprep.subr.bf16.mxu0 0
      %582 = vmatpush1.bf16.msra.mxu0 0
      %583 = vmatprep.subr.bf16.mxu0 0
      %584 = vmatpush1.bf16.msra.mxu0 0
      %585 = vmatprep.subr.bf16.mxu0 0
      %586 = vmatpush1.bf16.msra.mxu0 0
      %587 = vmatprep.mubr.bf16.mxu0 0
      %588 = vmatmul.mubr.bf16.gmra.mrb[0].mxu0 %v528
      %v589 = vpop.f32.mrb[0].mxu0
      %v590 = vadd.f32 0.0, %v589
      %v591 = vpop.f32.mrb[0].mxu0
      %v592 = vpop.f32.mrb[0].mxu0
      %v593 = vadd.f32 0.0, %v592
      %v594 = vpop.f32.mrb[0].mxu0
      %595 = vmatprep.mubr.bf16.mxu0 0
      %596 = vmatmul.mubr.bf16.gmra.mrb[0].mxu0 %v531
      %v597 = vpop.f32.mrb[0].mxu0
      %v598 = vadd.f32 0.0, %v597
      %v599 = vpop.f32.mrb[0].mxu0
      %v600 = vpop.f32.mrb[0].mxu0
      %v601 = vadd.f32 0.0, %v600
      %v602 = vpop.f32.mrb[0].mxu0
      %603 = vmatprep.mubr.bf16.mxu0 0
      %604 = vmatmul.mubr.bf16.gmra.mrb[0].mxu0 %v534
      %v605 = vpop.f32.mrb[0].mxu0
      %v606 = vadd.f32 0.0, %v605
      %v607 = vpop.f32.mrb[0].mxu0
      %v608 = vpop.f32.mrb[0].mxu0
      %v609 = vadd.f32 0.0, %v608
      %v610 = vpop.f32.mrb[0].mxu0
      %611 = vmatprep.mubr.bf16.mxu0 0
      %612 = vmatmul.mubr.bf16.gmra.mrb[0].mxu0 %v537
      %v613 = vpop.f32.mrb[0].mxu0
      %v614 = vadd.f32 0.0, %v613
      %v615 = vpop.f32.mrb[0].mxu0
      %v616 = vpop.f32.mrb[0].mxu0
      %v617 = vadd.f32 0.0, %v616
      %v618 = vpop.f32.mrb[0].mxu0
      %619 = vmatprep.mubr.bf16.mxu0 0
      %620 = vmatmul.mubr.bf16.gmra.mrb[0].mxu0 %v540
      %v621 = vpop.f32.mrb[0].mxu0
      %v622 = vadd.f32 0.0, %v621
      %v623 = vpop.f32.mrb[0].mxu0
      %v624 = vpop.f32.mrb[0].mxu0
      %v625 = vadd.f32 0.0, %v624
      %v626 = vpop.f32.mrb[0].mxu0
      %627 = vmatprep.mubr.bf16.mxu0 0
      %628 = vmatmul.mubr.bf16.gmra.mrb[0].mxu0 %v543
      %v629 = vpop.f32.mrb[0].mxu0
      %v630 = vadd.f32 0.0, %v629
      %v631 = vpop.f32.mrb[0].mxu0
      %v632 = vpop.f32.mrb[0].mxu0
      %v633 = vadd.f32 0.0, %v632
      %v634 = vpop.f32.mrb[0].mxu0
      %635 = vmatprep.mubr.bf16.mxu0 0
      %636 = vmatmul.mubr.bf16.gmra.mrb[0].mxu0 %v546
      %v637 = vpop.f32.mrb[0].mxu0
      %v638 = vadd.f32 0.0, %v637
      %v639 = vpop.f32.mrb[0].mxu0
      %v640 = vpop.f32.mrb[0].mxu0
      %v641 = vadd.f32 0.0, %v640
      %v642 = vpop.f32.mrb[0].mxu0
      %643 = vmatprep.mubr.bf16.mxu0 0
      %644 = vmatmul.mubr.bf16.gmra.mrb[0].mxu0 %v549
      %v645 = vpop.f32.mrb[0].mxu0
      %v646 = vadd.f32 0.0, %v645
      %v647 = vpop.f32.mrb[0].mxu0
      %v648 = vpop.f32.mrb[0].mxu0
      %v649 = vadd.f32 0.0, %v648
      %v650 = vpop.f32.mrb[0].mxu0
      %651 = vdwg.mxu0
      %v653 = vunpack.c.l.b16 %v466
      %v654 = vpack.c.b16 %v502, %v653
      %v655 = vpack.c.b16 %v504, %v503
      %v656 = vpack.c.b16 %v506, %v505
      %v657 = vpack.c.b16 %v508, %v507
      %v658 = vpack.c.b16 %v510, %v509
      %v659 = vpack.c.b16 %v512, %v511
      %v660 = vpack.c.b16 %v514, %v513
      %v661 = vpack.c.b16 %v516, %v515
      %v662 = vpack.c.b16 %v517, %v517
      %vm663 = vsmask.f32 4352
      %v665 = vshrl.u32 %v654, 16
      %v667 = vrot.slane %v665, 3
      %v668 = vshll.u32 %v654, 16
      %v670 = vrot.slane %v668, 4
      %v671 = vor.u32 %v667, %v670
      %v673 = vshrl.u32 %v655, 16
      %v675 = vrot.slane %v673, 3
      %v676 = vshll.u32 %v655, 16
      %v678 = vrot.slane %v676, 4
      %v679 = vor.u32 %v675, %v678
      %v680 = vsel %vm663, %v671, %v679
      %v682 = vshrl.u32 %v656, 16
      %v684 = vrot.slane %v682, 3
      %v685 = vshll.u32 %v656, 16
      %v687 = vrot.slane %v685, 4
      %v688 = vor.u32 %v684, %v687
      %v689 = vsel %vm663, %v679, %v688
      %v691 = vshrl.u32 %v657, 16
      %v693 = vrot.slane %v691, 3
      %v694 = vshll.u32 %v657, 16
      %v696 = vrot.slane %v694, 4
      %v697 = vor.u32 %v693, %v696
      %v698 = vsel %vm663, %v688, %v697
      %v700 = vshrl.u32 %v658, 16
      %v702 = vrot.slane %v700, 3
      %v703 = vshll.u32 %v658, 16
      %v705 = vrot.slane %v703, 4
      %v706 = vor.u32 %v702, %v705
      %v707 = vsel %vm663, %v697, %v706
      %v709 = vshrl.u32 %v659, 16
      %v711 = vrot.slane %v709, 3
      %v712 = vshll.u32 %v659, 16
      %v714 = vrot.slane %v712, 4
      %v715 = vor.u32 %v711, %v714
      %v716 = vsel %vm663, %v706, %v715
      %v718 = vshrl.u32 %v660, 16
      %v720 = vrot.slane %v718, 3
      %v721 = vshll.u32 %v660, 16
      %v723 = vrot.slane %v721, 4
      %v724 = vor.u32 %v720, %v723
      %v725 = vsel %vm663, %v715, %v724
      %v727 = vshrl.u32 %v661, 16
      %v729 = vrot.slane %v727, 3
      %v730 = vshll.u32 %v661, 16
      %v732 = vrot.slane %v730, 4
      %v733 = vor.u32 %v729, %v732
      %v734 = vsel %vm663, %v724, %v733
      %v736 = vshrl.u32 %v662, 16
      %v738 = vrot.slane %v736, 3
      %v739 = vshll.u32 %v662, 16
      %v741 = vrot.slane %v739, 4
      %v742 = vor.u32 %v738, %v741
      %v743 = vsel %vm663, %v733, %v742
      %v745 = vsel %vm526, %v680, 0
      %v748 = vsel %vm526, %v689, 0
      %v751 = vsel %vm526, %v698, 0
      %v754 = vsel %vm526, %v707, 0
      %v757 = vsel %vm526, %v716, 0
      %v760 = vsel %vm526, %v725, 0
      %v763 = vsel %vm526, %v734, 0
      %v766 = vsel %vm526, %v743, 0
      %v769 = vsel %vm551, %v483, 0
      %771 = vmatprep.subr.bf16.mxu0 0
      %772 = vmatpush1.bf16.msra.mxu0 %v769
      %773 = vmatprep.subr.bf16.mxu0 0
      %774 = vmatpush1.bf16.msra.mxu0 0
      %775 = vmatprep.subr.bf16.mxu0 0
      %776 = vmatpush1.bf16.msra.mxu0 0
      %777 = vmatprep.subr.bf16.mxu0 0
      %778 = vmatpush1.bf16.msra.mxu0 0
      %779 = vmatprep.subr.bf16.mxu0 0
      %780 = vmatpush1.bf16.msra.mxu0 0
      %781 = vmatprep.subr.bf16.mxu0 0
      %782 = vmatpush1.bf16.msra.mxu0 0
      %783 = vmatprep.subr.bf16.mxu0 0
      %784 = vmatpush1.bf16.msra.mxu0 0
      %785 = vmatprep.subr.bf16.mxu0 0
      %786 = vmatpush1.bf16.msra.mxu0 0
      %787 = vmatprep.subr.bf16.mxu0 0
      %788 = vmatpush1.bf16.msra.mxu0 0
      %789 = vmatprep.subr.bf16.mxu0 0
      %790 = vmatpush1.bf16.msra.mxu0 0
      %791 = vmatprep.subr.bf16.mxu0 0
      %792 = vmatpush1.bf16.msra.mxu0 0
      %793 = vmatprep.subr.bf16.mxu0 0
      %794 = vmatpush1.bf16.msra.mxu0 0
      %795 = vmatprep.subr.bf16.mxu0 0
      %796 = vmatpush1.bf16.msra.mxu0 0
      %797 = vmatprep.subr.bf16.mxu0 0
      %798 = vmatpush1.bf16.msra.mxu0 0
      %799 = vmatprep.subr.bf16.mxu0 0
      %800 = vmatpush1.bf16.msra.mxu0 0
      %801 = vmatprep.subr.bf16.mxu0 0
      %802 = vmatpush1.bf16.msra.mxu0 0
      %803 = vmatprep.mubr.bf16.mxu0 0
      %804 = vmatmul.mubr.bf16.gmra.mrb[0].mxu0 %v745
      %v805 = vpop.f32.mrb[0].mxu0
      %v806 = vadd.f32 %v590, %v805
      %v807 = vpop.f32.mrb[0].mxu0
      %v808 = vpop.f32.mrb[0].mxu0
      %v809 = vadd.f32 %v593, %v808
      %v810 = vpop.f32.mrb[0].mxu0
      %811 = vmatprep.mubr.bf16.mxu0 0
      %812 = vmatmul.mubr.bf16.gmra.mrb[0].mxu0 %v748
      %v813 = vpop.f32.mrb[0].mxu0
      %v814 = vadd.f32 %v598, %v813
      %v815 = vpop.f32.mrb[0].mxu0
      %v816 = vpop.f32.mrb[0].mxu0
      %v817 = vadd.f32 %v601, %v816
      %v818 = vpop.f32.mrb[0].mxu0
      %819 = vmatprep.mubr.bf16.mxu0 0
      %820 = vmatmul.mubr.bf16.gmra.mrb[0].mxu0 %v751
      %v821 = vpop.f32.mrb[0].mxu0
      %v822 = vadd.f32 %v606, %v821
      %v823 = vpop.f32.mrb[0].mxu0
      %v824 = vpop.f32.mrb[0].mxu0
      %v825 = vadd.f32 %v609, %v824
      %v826 = vpop.f32.mrb[0].mxu0
      %827 = vmatprep.mubr.bf16.mxu0 0
      %828 = vmatmul.mubr.bf16.gmra.mrb[0].mxu0 %v754
      %v829 = vpop.f32.mrb[0].mxu0
      %v830 = vadd.f32 %v614, %v829
      %v831 = vpop.f32.mrb[0].mxu0
      %v832 = vpop.f32.mrb[0].mxu0
      %v833 = vadd.f32 %v617, %v832
      %v834 = vpop.f32.mrb[0].mxu0
      %835 = vmatprep.mubr.bf16.mxu0 0
      %836 = vmatmul.mubr.bf16.gmra.mrb[0].mxu0 %v757
      %v837 = vpop.f32.mrb[0].mxu0
      %v838 = vadd.f32 %v622, %v837
      %v839 = vpop.f32.mrb[0].mxu0
      %v840 = vpop.f32.mrb[0].mxu0
      %v841 = vadd.f32 %v625, %v840
      %v842 = vpop.f32.mrb[0].mxu0
      %843 = vmatprep.mubr.bf16.mxu0 0
      %844 = vmatmul.mubr.bf16.gmra.mrb[0].mxu0 %v760
      %v845 = vpop.f32.mrb[0].mxu0
      %v846 = vadd.f32 %v630, %v845
      %v847 = vpop.f32.mrb[0].mxu0
      %v848 = vpop.f32.mrb[0].mxu0
      %v849 = vadd.f32 %v633, %v848
      %v850 = vpop.f32.mrb[0].mxu0
      %851 = vmatprep.mubr.bf16.mxu0 0
      %852 = vmatmul.mubr.bf16.gmra.mrb[0].mxu0 %v763
      %v853 = vpop.f32.mrb[0].mxu0
      %v854 = vadd.f32 %v638, %v853
      %v855 = vpop.f32.mrb[0].mxu0
      %v856 = vpop.f32.mrb[0].mxu0
      %v857 = vadd.f32 %v641, %v856
      %v858 = vpop.f32.mrb[0].mxu0
      %859 = vmatprep.mubr.bf16.mxu0 0
      %860 = vmatmul.mubr.bf16.gmra.mrb[0].mxu0 %v766
      %v861 = vpop.f32.mrb[0].mxu0
      %v862 = vadd.f32 %v646, %v861
      %v863 = vpop.f32.mrb[0].mxu0
      %v864 = vpop.f32.mrb[0].mxu0
      %v865 = vadd.f32 %v649, %v864
      %v866 = vpop.f32.mrb[0].mxu0
      %867 = vdwg.mxu0
      %v868 = vld [vmem:[%s206 + $0x8] sm:$0xf]
      %v869 = vld [vmem:[%s206 + $0xc] sm:$0xf]
      %v870 = vld [vmem:[%s206 + $0x10] sm:$0xf]
      %v871 = vld [vmem:[%s206 + $0x14] sm:$0xf]
      %v872 = vld [vmem:[%s206 + $0x18] sm:$0xf]
      %v873 = vld [vmem:[%s206 + $0x1c] sm:$0xf]
      %v874 = vld [vmem:[%s206 + $0x20] sm:$0xf]
      %v875 = vld [vmem:[%s206 + $0x24] sm:$0xf]
      %v876 = vld [vmem:[%s206 + $0x28] sm:$0xf]
      %v877 = vld [vmem:[%s206 + $0x2c] sm:$0xf]
      %v878 = vld [vmem:[%s206 + $0x30] sm:$0xf]
      %v879 = vld [vmem:[%s206 + $0x34] sm:$0xf]
      %v880 = vld [vmem:[%s206 + $0x38] sm:$0xf]
      %v881 = vld [vmem:[%s206 + $0x3c] sm:$0xf]
      %v882 = vld [vmem:[%s206 + $0x40] sm:$0xf]
      %v883 = vld [vmem:[%s206 + $0x44] sm:$0xf]
      %v884 = vld [vmem:[%s206 + $0x48] sm:$0x1]
      %s885 = scalar_lea.vmem %s210, 8
      %v886 = vld [vmem:[%s885] sm:$0xf]
      %v904 = vunpack.c.l.b16 %v868
      %v905 = vunpack.c.l.b16 %v869
      %v906 = vunpack.c.l.b16 %v870
      %v907 = vunpack.c.l.b16 %v871
      %v908 = vunpack.c.l.b16 %v872
      %v909 = vunpack.c.l.b16 %v873
      %v910 = vunpack.c.l.b16 %v874
      %v911 = vunpack.c.l.b16 %v875
      %v912 = vunpack.c.l.b16 %v876
      %v913 = vunpack.c.l.b16 %v877
      %v914 = vunpack.c.l.b16 %v878
      %v915 = vunpack.c.l.b16 %v879
      %v916 = vunpack.c.l.b16 %v880
      %v917 = vunpack.c.l.b16 %v881
      %v918 = vunpack.c.l.b16 %v882
      %v919 = vunpack.c.l.b16 %v883
      %v920 = vunpack.c.l.b16 %v884
      %v921 = vpack.c.b16 %v905, %v904
      %v922 = vpack.c.b16 %v907, %v906
      %v923 = vpack.c.b16 %v909, %v908
      %v924 = vpack.c.b16 %v911, %v910
      %v925 = vpack.c.b16 %v913, %v912
      %v926 = vpack.c.b16 %v915, %v914
      %v927 = vpack.c.b16 %v917, %v916
      %v928 = vpack.c.b16 %v919, %v918
      %v929 = vpack.c.b16 %v920, %v920
      %vm930 = vsmask.f32 7424
      %v932 = vshrl.u32 %v921, 16
      %v934 = vshll.u32 %v921, 16
      %v936 = vrot.slane %v934, 1
      %v937 = vor.u32 %v932, %v936
      %v939 = vshll.u32 %v922, 16
      %v941 = vrot.slane %v939, 1
      %v942 = vsel %vm930, %v937, %v941
      %v943 = vshrl.u32 %v922, 16
      %v945 = vor.u32 %v943, %v941
      %v947 = vshll.u32 %v923, 16
      %v949 = vrot.slane %v947, 1
      %v950 = vsel %vm930, %v945, %v949
      %v951 = vshrl.u32 %v923, 16
      %v953 = vor.u32 %v951, %v949
      %v955 = vshll.u32 %v924, 16
      %v957 = vrot.slane %v955, 1
      %v958 = vsel %vm930, %v953, %v957
      %v959 = vshrl.u32 %v924, 16
      %v961 = vor.u32 %v959, %v957
      %v963 = vshll.u32 %v925, 16
      %v965 = vrot.slane %v963, 1
      %v966 = vsel %vm930, %v961, %v965
      %v967 = vshrl.u32 %v925, 16
      %v969 = vor.u32 %v967, %v965
      %v971 = vshll.u32 %v926, 16
      %v973 = vrot.slane %v971, 1
      %v974 = vsel %vm930, %v969, %v973
      %v975 = vshrl.u32 %v926, 16
      %v977 = vor.u32 %v975, %v973
      %v979 = vshll.u32 %v927, 16
      %v981 = vrot.slane %v979, 1
      %v982 = vsel %vm930, %v977, %v981
      %v983 = vshrl.u32 %v927, 16
      %v985 = vor.u32 %v983, %v981
      %v987 = vshll.u32 %v928, 16
      %v989 = vrot.slane %v987, 1
      %v990 = vsel %vm930, %v985, %v989
      %v991 = vshrl.u32 %v928, 16
      %v993 = vor.u32 %v991, %v989
      %v995 = vshll.u32 %v929, 16
      %v997 = vrot.slane %v995, 1
      %v998 = vsel %vm930, %v993, %v997
      %v1000 = vsel %vm526, %v942, 0
      %v1003 = vsel %vm526, %v950, 0
      %v1006 = vsel %vm526, %v958, 0
      %v1009 = vsel %vm526, %v966, 0
      %v1012 = vsel %vm526, %v974, 0
      %v1015 = vsel %vm526, %v982, 0
      %v1018 = vsel %vm526, %v990, 0
      %v1021 = vsel %vm526, %v998, 0
      %v1024 = vsel %vm551, %v886, 0
      %1026 = vmatprep.subr.bf16.mxu0 0
      %1027 = vmatpush1.bf16.msra.mxu0 %v1024
      %1028 = vmatprep.subr.bf16.mxu0 0
      %1029 = vmatpush1.bf16.msra.mxu0 0
      %1030 = vmatprep.subr.bf16.mxu0 0
      %1031 = vmatpush1.bf16.msra.mxu0 0
      %1032 = vmatprep.subr.bf16.mxu0 0
      %1033 = vmatpush1.bf16.msra.mxu0 0
      %1034 = vmatprep.subr.bf16.mxu0 0
      %1035 = vmatpush1.bf16.msra.mxu0 0
      %1036 = vmatprep.subr.bf16.mxu0 0
      %1037 = vmatpush1.bf16.msra.mxu0 0
      %1038 = vmatprep.subr.bf16.mxu0 0
      %1039 = vmatpush1.bf16.msra.mxu0 0
      %1040 = vmatprep.subr.bf16.mxu0 0
      %1041 = vmatpush1.bf16.msra.mxu0 0
      %1042 = vmatprep.subr.bf16.mxu0 0
      %1043 = vmatpush1.bf16.msra.mxu0 0
      %1044 = vmatprep.subr.bf16.mxu0 0
      %1045 = vmatpush1.bf16.msra.mxu0 0
      %1046 = vmatprep.subr.bf16.mxu0 0
      %1047 = vmatpush1.bf16.msra.mxu0 0
      %1048 = vmatprep.subr.bf16.mxu0 0
      %1049 = vmatpush1.bf16.msra.mxu0 0
      %1050 = vmatprep.subr.bf16.mxu0 0
      %1051 = vmatpush1.bf16.msra.mxu0 0
      %1052 = vmatprep.subr.bf16.mxu0 0
      %1053 = vmatpush1.bf16.msra.mxu0 0
      %1054 = vmatprep.subr.bf16.mxu0 0
      %1055 = vmatpush1.bf16.msra.mxu0 0
      %1056 = vmatprep.subr.bf16.mxu0 0
      %1057 = vmatpush1.bf16.msra.mxu0 0
      %1058 = vmatprep.mubr.bf16.mxu0 0
      %1059 = vmatmul.mubr.bf16.gmra.mrb[0].mxu0 %v1000
      %v1060 = vpop.f32.mrb[0].mxu0
      %v1061 = vadd.f32 0.0, %v1060
      %v1062 = vpop.f32.mrb[0].mxu0
      %v1063 = vpop.f32.mrb[0].mxu0
      %v1064 = vadd.f32 0.0, %v1063
      %v1065 = vpop.f32.mrb[0].mxu0
      %1066 = vmatprep.mubr.bf16.mxu0 0
      %1067 = vmatmul.mubr.bf16.gmra.mrb[0].mxu0 %v1003
      %v1068 = vpop.f32.mrb[0].mxu0
      %v1069 = vadd.f32 0.0, %v1068
      %v1070 = vpop.f32.mrb[0].mxu0
      %v1071 = vpop.f32.mrb[0].mxu0
      %v1072 = vadd.f32 0.0, %v1071
      %v1073 = vpop.f32.mrb[0].mxu0
      %1074 = vmatprep.mubr.bf16.mxu0 0
      %1075 = vmatmul.mubr.bf16.gmra.mrb[0].mxu0 %v1006
      %v1076 = vpop.f32.mrb[0].mxu0
      %v1077 = vadd.f32 0.0, %v1076
      %v1078 = vpop.f32.mrb[0].mxu0
      %v1079 = vpop.f32.mrb[0].mxu0
      %v1080 = vadd.f32 0.0, %v1079
      %v1081 = vpop.f32.mrb[0].mxu0
      %1082 = vmatprep.mubr.bf16.mxu0 0
      %1083 = vmatmul.mubr.bf16.gmra.mrb[0].mxu0 %v1009
      %v1084 = vpop.f32.mrb[0].mxu0
      %v1085 = vadd.f32 0.0, %v1084
      %v1086 = vpop.f32.mrb[0].mxu0
      %v1087 = vpop.f32.mrb[0].mxu0
      %v1088 = vadd.f32 0.0, %v1087
      %v1089 = vpop.f32.mrb[0].mxu0
      %1090 = vmatprep.mubr.bf16.mxu0 0
      %1091 = vmatmul.mubr.bf16.gmra.mrb[0].mxu0 %v1012
      %v1092 = vpop.f32.mrb[0].mxu0
      %v1093 = vadd.f32 0.0, %v1092
      %v1094 = vpop.f32.mrb[0].mxu0
      %v1095 = vpop.f32.mrb[0].mxu0
      %v1096 = vadd.f32 0.0, %v1095
      %v1097 = vpop.f32.mrb[0].mxu0
      %1098 = vmatprep.mubr.bf16.mxu0 0
      %1099 = vmatmul.mubr.bf16.gmra.mrb[0].mxu0 %v1015
      %v1100 = vpop.f32.mrb[0].mxu0
      %v1101 = vadd.f32 0.0, %v1100
      %v1102 = vpop.f32.mrb[0].mxu0
      %v1103 = vpop.f32.mrb[0].mxu0
      %v1104 = vadd.f32 0.0, %v1103
      %v1105 = vpop.f32.mrb[0].mxu0
      %1106 = vmatprep.mubr.bf16.mxu0 0
      %1107 = vmatmul.mubr.bf16.gmra.mrb[0].mxu0 %v1018
      %v1108 = vpop.f32.mrb[0].mxu0
      %v1109 = vadd.f32 0.0, %v1108
      %v1110 = vpop.f32.mrb[0].mxu0
      %v1111 = vpop.f32.mrb[0].mxu0
      %v1112 = vadd.f32 0.0, %v1111
      %v1113 = vpop.f32.mrb[0].mxu0
      %1114 = vmatprep.mubr.bf16.mxu0 0
      %1115 = vmatmul.mubr.bf16.gmra.mrb[0].mxu0 %v1021
      %v1116 = vpop.f32.mrb[0].mxu0
      %v1117 = vadd.f32 0.0, %v1116
      %v1118 = vpop.f32.mrb[0].mxu0
      %v1119 = vpop.f32.mrb[0].mxu0
      %v1120 = vadd.f32 0.0, %v1119
      %v1121 = vpop.f32.mrb[0].mxu0
      %1122 = vdwg.mxu0
      %v1123 = vadd.f32 %v806, %v1061
      %v1124 = vadd.f32 %v809, %v1064
      %v1125 = vadd.f32 %v814, %v1069
      %v1126 = vadd.f32 %v817, %v1072
      %v1127 = vadd.f32 %v822, %v1077
      %v1128 = vadd.f32 %v825, %v1080
      %v1129 = vadd.f32 %v830, %v1085
      %v1130 = vadd.f32 %v833, %v1088
      %v1131 = vadd.f32 %v838, %v1093
      %v1132 = vadd.f32 %v841, %v1096
      %v1133 = vadd.f32 %v846, %v1101
      %v1134 = vadd.f32 %v849, %v1104
      %v1135 = vadd.f32 %v854, %v1109
      %v1136 = vadd.f32 %v857, %v1112
      %v1137 = vadd.f32 %v862, %v1117
      %v1138 = vadd.f32 %v865, %v1120
      %v1139 = vld [vmem:[%s206 + $0xc] sm:$0x8]
      %v1140 = vld [vmem:[%s206 + $0x10] sm:$0xf]
      %v1141 = vld [vmem:[%s206 + $0x14] sm:$0xf]
      %v1142 = vld [vmem:[%s206 + $0x18] sm:$0xf]
      %v1143 = vld [vmem:[%s206 + $0x1c] sm:$0xf]
      %v1144 = vld [vmem:[%s206 + $0x20] sm:$0xf]
      %v1145 = vld [vmem:[%s206 + $0x24] sm:$0xf]
      %v1146 = vld [vmem:[%s206 + $0x28] sm:$0xf]
      %v1147 = vld [vmem:[%s206 + $0x2c] sm:$0xf]
      %v1148 = vld [vmem:[%s206 + $0x30] sm:$0xf]
      %v1149 = vld [vmem:[%s206 + $0x34] sm:$0xf]
      %v1150 = vld [vmem:[%s206 + $0x38] sm:$0xf]
      %v1151 = vld [vmem:[%s206 + $0x3c] sm:$0xf]
      %v1152 = vld [vmem:[%s206 + $0x40] sm:$0xf]
      %v1153 = vld [vmem:[%s206 + $0x44] sm:$0xf]
      %v1154 = vld [vmem:[%s206 + $0x48] sm:$0xf]
      %v1155 = vld [vmem:[%s206 + $0x4c] sm:$0xf]
      %s1156 = scalar_lea.vmem %s210, 12
      %v1157 = vld [vmem:[%s1156] sm:$0xf]
      %v1175 = vunpack.c.l.b16 %v1139
      %v1176 = vunpack.c.l.b16 %v1140
      %v1177 = vunpack.c.l.b16 %v1141
      %v1178 = vunpack.c.l.b16 %v1142
      %v1179 = vunpack.c.l.b16 %v1143
      %v1180 = vunpack.c.l.b16 %v1144
      %v1181 = vunpack.c.l.b16 %v1145
      %v1182 = vunpack.c.l.b16 %v1146
      %v1183 = vunpack.c.l.b16 %v1147
      %v1184 = vunpack.c.l.b16 %v1148
      %v1185 = vunpack.c.l.b16 %v1149
      %v1186 = vunpack.c.l.b16 %v1150
      %v1187 = vunpack.c.l.b16 %v1151
      %v1188 = vunpack.c.l.b16 %v1152
      %v1189 = vunpack.c.l.b16 %v1153
      %v1190 = vunpack.c.l.b16 %v1154
      %v1191 = vunpack.c.l.b16 %v1155
      %v1192 = vpack.c.b16 %v1176, %v1175
      %v1193 = vpack.c.b16 %v1178, %v1177
      %v1194 = vpack.c.b16 %v1180, %v1179
      %v1195 = vpack.c.b16 %v1182, %v1181
      %v1196 = vpack.c.b16 %v1184, %v1183
      %v1197 = vpack.c.b16 %v1186, %v1185
      %v1198 = vpack.c.b16 %v1188, %v1187
      %v1199 = vpack.c.b16 %v1190, %v1189
      %v1200 = vpack.c.b16 %v1191, %v1191
      %v1202 = vshrl.u32 %v1192, 16
      %v1204 = vrot.slane %v1202, 3
      %v1205 = vshll.u32 %v1192, 16
      %v1207 = vrot.slane %v1205, 4
      %v1208 = vor.u32 %v1204, %v1207
      %v1210 = vshrl.u32 %v1193, 16
      %v1212 = vrot.slane %v1210, 3
      %v1213 = vshll.u32 %v1193, 16
      %v1215 = vrot.slane %v1213, 4
      %v1216 = vor.u32 %v1212, %v1215
      %v1217 = vsel %vm663, %v1208, %v1216
      %v1219 = vshrl.u32 %v1194, 16
      %v1221 = vrot.slane %v1219, 3
      %v1222 = vshll.u32 %v1194, 16
      %v1224 = vrot.slane %v1222, 4
      %v1225 = vor.u32 %v1221, %v1224
      %v1226 = vsel %vm663, %v1216, %v1225
      %v1228 = vshrl.u32 %v1195, 16
      %v1230 = vrot.slane %v1228, 3
      %v1231 = vshll.u32 %v1195, 16
      %v1233 = vrot.slane %v1231, 4
      %v1234 = vor.u32 %v1230, %v1233
      %v1235 = vsel %vm663, %v1225, %v1234
      %v1237 = vshrl.u32 %v1196, 16
      %v1239 = vrot.slane %v1237, 3
      %v1240 = vshll.u32 %v1196, 16
      %v1242 = vrot.slane %v1240, 4
      %v1243 = vor.u32 %v1239, %v1242
      %v1244 = vsel %vm663, %v1234, %v1243
      %v1246 = vshrl.u32 %v1197, 16
      %v1248 = vrot.slane %v1246, 3
      %v1249 = vshll.u32 %v1197, 16
      %v1251 = vrot.slane %v1249, 4
      %v1252 = vor.u32 %v1248, %v1251
      %v1253 = vsel %vm663, %v1243, %v1252
      %v1255 = vshrl.u32 %v1198, 16
      %v1257 = vrot.slane %v1255, 3
      %v1258 = vshll.u32 %v1198, 16
      %v1260 = vrot.slane %v1258, 4
      %v1261 = vor.u32 %v1257, %v1260
      %v1262 = vsel %vm663, %v1252, %v1261
      %v1264 = vshrl.u32 %v1199, 16
      %v1266 = vrot.slane %v1264, 3
      %v1267 = vshll.u32 %v1199, 16
      %v1269 = vrot.slane %v1267, 4
      %v1270 = vor.u32 %v1266, %v1269
      %v1271 = vsel %vm663, %v1261, %v1270
      %v1273 = vshrl.u32 %v1200, 16
      %v1275 = vrot.slane %v1273, 3
      %v1276 = vshll.u32 %v1200, 16
      %v1278 = vrot.slane %v1276, 4
      %v1279 = vor.u32 %v1275, %v1278
      %v1280 = vsel %vm663, %v1270, %v1279
      %v1282 = vsel %vm526, %v1217, 0
      %v1285 = vsel %vm526, %v1226, 0
      %v1288 = vsel %vm526, %v1235, 0
      %v1291 = vsel %vm526, %v1244, 0
      %v1294 = vsel %vm526, %v1253, 0
      %v1297 = vsel %vm526, %v1262, 0
      %v1300 = vsel %vm526, %v1271, 0
      %v1303 = vsel %vm526, %v1280, 0
      %v1306 = vsel %vm551, %v1157, 0
      %1308 = vmatprep.subr.bf16.mxu0 0
      %1309 = vmatpush1.bf16.msra.mxu0 %v1306
      %1310 = vmatprep.subr.bf16.mxu0 0
      %1311 = vmatpush1.bf16.msra.mxu0 0
      %1312 = vmatprep.subr.bf16.mxu0 0
      %1313 = vmatpush1.bf16.msra.mxu0 0
      %1314 = vmatprep.subr.bf16.mxu0 0
      %1315 = vmatpush1.bf16.msra.mxu0 0
      %1316 = vmatprep.subr.bf16.mxu0 0
      %1317 = vmatpush1.bf16.msra.mxu0 0
      %1318 = vmatprep.subr.bf16.mxu0 0
      %1319 = vmatpush1.bf16.msra.mxu0 0
      %1320 = vmatprep.subr.bf16.mxu0 0
      %1321 = vmatpush1.bf16.msra.mxu0 0
      %1322 = vmatprep.subr.bf16.mxu0 0
      %1323 = vmatpush1.bf16.msra.mxu0 0
      %1324 = vmatprep.subr.bf16.mxu0 0
      %1325 = vmatpush1.bf16.msra.mxu0 0
      %1326 = vmatprep.subr.bf16.mxu0 0
      %1327 = vmatpush1.bf16.msra.mxu0 0
      %1328 = vmatprep.subr.bf16.mxu0 0
      %1329 = vmatpush1.bf16.msra.mxu0 0
      %1330 = vmatprep.subr.bf16.mxu0 0
      %1331 = vmatpush1.bf16.msra.mxu0 0
      %1332 = vmatprep.subr.bf16.mxu0 0
      %1333 = vmatpush1.bf16.msra.mxu0 0
      %1334 = vmatprep.subr.bf16.mxu0 0
      %1335 = vmatpush1.bf16.msra.mxu0 0
      %1336 = vmatprep.subr.bf16.mxu0 0
      %1337 = vmatpush1.bf16.msra.mxu0 0
      %1338 = vmatprep.subr.bf16.mxu0 0
      %1339 = vmatpush1.bf16.msra.mxu0 0
      %1340 = vmatprep.mubr.bf16.mxu0 0
      %1341 = vmatmul.mubr.bf16.gmra.mrb[0].mxu0 %v1282
      %v1342 = vpop.f32.mrb[0].mxu0
      %v1343 = vadd.f32 0.0, %v1342
      %v1344 = vpop.f32.mrb[0].mxu0
      %v1345 = vpop.f32.mrb[0].mxu0
      %v1346 = vadd.f32 0.0, %v1345
      %v1347 = vpop.f32.mrb[0].mxu0
      %1348 = vmatprep.mubr.bf16.mxu0 0
      %1349 = vmatmul.mubr.bf16.gmra.mrb[0].mxu0 %v1285
      %v1350 = vpop.f32.mrb[0].mxu0
      %v1351 = vadd.f32 0.0, %v1350
      %v1352 = vpop.f32.mrb[0].mxu0
      %v1353 = vpop.f32.mrb[0].mxu0
      %v1354 = vadd.f32 0.0, %v1353
      %v1355 = vpop.f32.mrb[0].mxu0
      %1356 = vmatprep.mubr.bf16.mxu0 0
      %1357 = vmatmul.mubr.bf16.gmra.mrb[0].mxu0 %v1288
      %v1358 = vpop.f32.mrb[0].mxu0
      %v1359 = vadd.f32 0.0, %v1358
      %v1360 = vpop.f32.mrb[0].mxu0
      %v1361 = vpop.f32.mrb[0].mxu0
      %v1362 = vadd.f32 0.0, %v1361
      %v1363 = vpop.f32.mrb[0].mxu0
      %1364 = vmatprep.mubr.bf16.mxu0 0
      %1365 = vmatmul.mubr.bf16.gmra.mrb[0].mxu0 %v1291
      %v1366 = vpop.f32.mrb[0].mxu0
      %v1367 = vadd.f32 0.0, %v1366
      %v1368 = vpop.f32.mrb[0].mxu0
      %v1369 = vpop.f32.mrb[0].mxu0
      %v1370 = vadd.f32 0.0, %v1369
      %v1371 = vpop.f32.mrb[0].mxu0
      %1372 = vmatprep.mubr.bf16.mxu0 0
      %1373 = vmatmul.mubr.bf16.gmra.mrb[0].mxu0 %v1294
      %v1374 = vpop.f32.mrb[0].mxu0
      %v1375 = vadd.f32 0.0, %v1374
      %v1376 = vpop.f32.mrb[0].mxu0
      %v1377 = vpop.f32.mrb[0].mxu0
      %v1378 = vadd.f32 0.0, %v1377
      %v1379 = vpop.f32.mrb[0].mxu0
      %1380 = vmatprep.mubr.bf16.mxu0 0
      %1381 = vmatmul.mubr.bf16.gmra.mrb[0].mxu0 %v1297
      %v1382 = vpop.f32.mrb[0].mxu0
      %v1383 = vadd.f32 0.0, %v1382
      %v1384 = vpop.f32.mrb[0].mxu0
      %v1385 = vpop.f32.mrb[0].mxu0
      %v1386 = vadd.f32 0.0, %v1385
      %v1387 = vpop.f32.mrb[0].mxu0
      %1388 = vmatprep.mubr.bf16.mxu0 0
      %1389 = vmatmul.mubr.bf16.gmra.mrb[0].mxu0 %v1300
      %v1390 = vpop.f32.mrb[0].mxu0
      %v1391 = vadd.f32 0.0, %v1390
      %v1392 = vpop.f32.mrb[0].mxu0
      %v1393 = vpop.f32.mrb[0].mxu0
      %v1394 = vadd.f32 0.0, %v1393
      %v1395 = vpop.f32.mrb[0].mxu0
      %1396 = vmatprep.mubr.bf16.mxu0 0
      %1397 = vmatmul.mubr.bf16.gmra.mrb[0].mxu0 %v1303
      %v1398 = vpop.f32.mrb[0].mxu0
      %v1399 = vadd.f32 0.0, %v1398
      %v1400 = vpop.f32.mrb[0].mxu0
      %v1401 = vpop.f32.mrb[0].mxu0
      %v1402 = vadd.f32 0.0, %v1401
      %v1403 = vpop.f32.mrb[0].mxu0
      %1404 = vdwg.mxu0
      %v1405 = vadd.f32 %v1123, %v1343
      %v1406 = vadd.f32 %v1124, %v1346
      %v1407 = vadd.f32 %v1125, %v1351
      %v1408 = vadd.f32 %v1126, %v1354
      %v1409 = vadd.f32 %v1127, %v1359
      %v1410 = vadd.f32 %v1128, %v1362
      %v1411 = vadd.f32 %v1129, %v1367
      %v1412 = vadd.f32 %v1130, %v1370
      %v1413 = vadd.f32 %v1131, %v1375
      %v1414 = vadd.f32 %v1132, %v1378
      %v1415 = vadd.f32 %v1133, %v1383
      %v1416 = vadd.f32 %v1134, %v1386
      %v1417 = vadd.f32 %v1135, %v1391
      %v1418 = vadd.f32 %v1136, %v1394
      %v1419 = vadd.f32 %v1137, %v1399
      %v1420 = vadd.f32 %v1138, %v1402
      %s1421 = scalar_lea.vmem %s210, 16
      %v1422 = vld [vmem:[%s1421] sm:$0xf]
      %v1423 = vpack.c.b16 %v1177, %v1176
      %v1424 = vpack.c.b16 %v1179, %v1178
      %v1425 = vpack.c.b16 %v1181, %v1180
      %v1426 = vpack.c.b16 %v1183, %v1182
      %v1427 = vpack.c.b16 %v1185, %v1184
      %v1428 = vpack.c.b16 %v1187, %v1186
      %v1429 = vpack.c.b16 %v1189, %v1188
      %v1430 = vpack.c.b16 %v1191, %v1190
      %v1432 = vsel %vm526, %v1423, 0
      %v1435 = vsel %vm526, %v1424, 0
      %v1438 = vsel %vm526, %v1425, 0
      %v1441 = vsel %vm526, %v1426, 0
      %v1444 = vsel %vm526, %v1427, 0
      %v1447 = vsel %vm526, %v1428, 0
      %v1450 = vsel %vm526, %v1429, 0
      %v1453 = vsel %vm526, %v1430, 0
      %v1456 = vsel %vm551, %v1422, 0
      %1458 = vmatprep.subr.bf16.mxu0 0
      %1459 = vmatpush1.bf16.msra.mxu0 %v1456
      %1460 = vmatprep.subr.bf16.mxu0 0
      %1461 = vmatpush1.bf16.msra.mxu0 0
      %1462 = vmatprep.subr.bf16.mxu0 0
      %1463 = vmatpush1.bf16.msra.mxu0 0
      %1464 = vmatprep.subr.bf16.mxu0 0
      %1465 = vmatpush1.bf16.msra.mxu0 0
      %1466 = vmatprep.subr.bf16.mxu0 0
      %1467 = vmatpush1.bf16.msra.mxu0 0
      %1468 = vmatprep.subr.bf16.mxu0 0
      %1469 = vmatpush1.bf16.msra.mxu0 0
      %1470 = vmatprep.subr.bf16.mxu0 0
      %1471 = vmatpush1.bf16.msra.mxu0 0
      %1472 = vmatprep.subr.bf16.mxu0 0
      %1473 = vmatpush1.bf16.msra.mxu0 0
      %1474 = vmatprep.subr.bf16.mxu0 0
      %1475 = vmatpush1.bf16.msra.mxu0 0
      %1476 = vmatprep.subr.bf16.mxu0 0
      %1477 = vmatpush1.bf16.msra.mxu0 0
      %1478 = vmatprep.subr.bf16.mxu0 0
      %1479 = vmatpush1.bf16.msra.mxu0 0
      %1480 = vmatprep.subr.bf16.mxu0 0
      %1481 = vmatpush1.bf16.msra.mxu0 0
      %1482 = vmatprep.subr.bf16.mxu0 0
      %1483 = vmatpush1.bf16.msra.mxu0 0
      %1484 = vmatprep.subr.bf16.mxu0 0
      %1485 = vmatpush1.bf16.msra.mxu0 0
      %1486 = vmatprep.subr.bf16.mxu0 0
      %1487 = vmatpush1.bf16.msra.mxu0 0
      %1488 = vmatprep.subr.bf16.mxu0 0
      %1489 = vmatpush1.bf16.msra.mxu0 0
      %1490 = vmatprep.mubr.bf16.mxu0 0
      %1491 = vmatmul.mubr.bf16.gmra.mrb[0].mxu0 %v1432
      %v1492 = vpop.f32.mrb[0].mxu0
      %v1493 = vadd.f32 0.0, %v1492
      %v1494 = vpop.f32.mrb[0].mxu0
      %v1495 = vpop.f32.mrb[0].mxu0
      %v1496 = vadd.f32 0.0, %v1495
      %v1497 = vpop.f32.mrb[0].mxu0
      %1498 = vmatprep.mubr.bf16.mxu0 0
      %1499 = vmatmul.mubr.bf16.gmra.mrb[0].mxu0 %v1435
      %v1500 = vpop.f32.mrb[0].mxu0
      %v1501 = vadd.f32 0.0, %v1500
      %v1502 = vpop.f32.mrb[0].mxu0
      %v1503 = vpop.f32.mrb[0].mxu0
      %v1504 = vadd.f32 0.0, %v1503
      %v1505 = vpop.f32.mrb[0].mxu0
      %1506 = vmatprep.mubr.bf16.mxu0 0
      %1507 = vmatmul.mubr.bf16.gmra.mrb[0].mxu0 %v1438
      %v1508 = vpop.f32.mrb[0].mxu0
      %v1509 = vadd.f32 0.0, %v1508
      %v1510 = vpop.f32.mrb[0].mxu0
      %v1511 = vpop.f32.mrb[0].mxu0
      %v1512 = vadd.f32 0.0, %v1511
      %v1513 = vpop.f32.mrb[0].mxu0
      %1514 = vmatprep.mubr.bf16.mxu0 0
      %1515 = vmatmul.mubr.bf16.gmra.mrb[0].mxu0 %v1441
      %v1516 = vpop.f32.mrb[0].mxu0
      %v1517 = vadd.f32 0.0, %v1516
      %v1518 = vpop.f32.mrb[0].mxu0
      %v1519 = vpop.f32.mrb[0].mxu0
      %v1520 = vadd.f32 0.0, %v1519
      %v1521 = vpop.f32.mrb[0].mxu0
      %1522 = vmatprep.mubr.bf16.mxu0 0
      %1523 = vmatmul.mubr.bf16.gmra.mrb[0].mxu0 %v1444
      %v1524 = vpop.f32.mrb[0].mxu0
      %v1525 = vadd.f32 0.0, %v1524
      %v1526 = vpop.f32.mrb[0].mxu0
      %v1527 = vpop.f32.mrb[0].mxu0
      %v1528 = vadd.f32 0.0, %v1527
      %v1529 = vpop.f32.mrb[0].mxu0
      %1530 = vmatprep.mubr.bf16.mxu0 0
      %1531 = vmatmul.mubr.bf16.gmra.mrb[0].mxu0 %v1447
      %v1532 = vpop.f32.mrb[0].mxu0
      %v1533 = vadd.f32 0.0, %v1532
      %v1534 = vpop.f32.mrb[0].mxu0
      %v1535 = vpop.f32.mrb[0].mxu0
      %v1536 = vadd.f32 0.0, %v1535
      %v1537 = vpop.f32.mrb[0].mxu0
      %1538 = vmatprep.mubr.bf16.mxu0 0
      %1539 = vmatmul.mubr.bf16.gmra.mrb[0].mxu0 %v1450
      %v1540 = vpop.f32.mrb[0].mxu0
      %v1541 = vadd.f32 0.0, %v1540
      %v1542 = vpop.f32.mrb[0].mxu0
      %v1543 = vpop.f32.mrb[0].mxu0
      %v1544 = vadd.f32 0.0, %v1543
      %v1545 = vpop.f32.mrb[0].mxu0
      %1546 = vmatprep.mubr.bf16.mxu0 0
      %1547 = vmatmul.mubr.bf16.gmra.mrb[0].mxu0 %v1453
      %v1548 = vpop.f32.mrb[0].mxu0
      %v1549 = vadd.f32 0.0, %v1548
      %v1550 = vpop.f32.mrb[0].mxu0
      %v1551 = vpop.f32.mrb[0].mxu0
      %v1552 = vadd.f32 0.0, %v1551
      %v1553 = vpop.f32.mrb[0].mxu0
      %1554 = vdwg.mxu0
      %v1555 = vadd.f32 %v1405, %v1493
      %v1556 = vadd.f32 %v1406, %v1496
      %v1557 = vadd.f32 %v1407, %v1501
      %v1558 = vadd.f32 %v1408, %v1504
      %v1559 = vadd.f32 %v1409, %v1509
      %v1560 = vadd.f32 %v1410, %v1512
      %v1561 = vadd.f32 %v1411, %v1517
      %v1562 = vadd.f32 %v1412, %v1520
      %v1563 = vadd.f32 %v1413, %v1525
      %v1564 = vadd.f32 %v1414, %v1528
      %v1565 = vadd.f32 %v1415, %v1533
      %v1566 = vadd.f32 %v1416, %v1536
      %v1567 = vadd.f32 %v1417, %v1541
      %v1568 = vadd.f32 %v1418, %v1544
      %v1569 = vadd.f32 %v1419, %v1549
      %v1570 = vadd.f32 %v1420, %v1552
      %v1571 = vld [vmem:[%s206 + $0x10] sm:$0xf]
      %v1572 = vld [vmem:[%s206 + $0x14] sm:$0xf]
      %v1573 = vld [vmem:[%s206 + $0x18] sm:$0xf]
      %v1574 = vld [vmem:[%s206 + $0x1c] sm:$0xf]
      %v1575 = vld [vmem:[%s206 + $0x20] sm:$0xf]
      %v1576 = vld [vmem:[%s206 + $0x24] sm:$0xf]
      %v1577 = vld [vmem:[%s206 + $0x28] sm:$0xf]
      %v1578 = vld [vmem:[%s206 + $0x2c] sm:$0xf]
      %v1579 = vld [vmem:[%s206 + $0x30] sm:$0xf]
      %v1580 = vld [vmem:[%s206 + $0x34] sm:$0xf]
      %v1581 = vld [vmem:[%s206 + $0x38] sm:$0xf]
      %v1582 = vld [vmem:[%s206 + $0x3c] sm:$0xf]
      %v1583 = vld [vmem:[%s206 + $0x40] sm:$0xf]
      %v1584 = vld [vmem:[%s206 + $0x44] sm:$0xf]
      %v1585 = vld [vmem:[%s206 + $0x48] sm:$0xf]
      %v1586 = vld [vmem:[%s206 + $0x4c] sm:$0xf]
      %v1587 = vld [vmem:[%s206 + $0x50] sm:$0x1]
      %s1588 = scalar_lea.vmem %s210, 20
      %v1589 = vld [vmem:[%s1588] sm:$0xf]
      %v1607 = vunpack.c.l.b16 %v1571
      %v1608 = vunpack.c.l.b16 %v1572
      %v1609 = vunpack.c.l.b16 %v1573
      %v1610 = vunpack.c.l.b16 %v1574
      %v1611 = vunpack.c.l.b16 %v1575
      %v1612 = vunpack.c.l.b16 %v1576
      %v1613 = vunpack.c.l.b16 %v1577
      %v1614 = vunpack.c.l.b16 %v1578
      %v1615 = vunpack.c.l.b16 %v1579
      %v1616 = vunpack.c.l.b16 %v1580
      %v1617 = vunpack.c.l.b16 %v1581
      %v1618 = vunpack.c.l.b16 %v1582
      %v1619 = vunpack.c.l.b16 %v1583
      %v1620 = vunpack.c.l.b16 %v1584
      %v1621 = vunpack.c.l.b16 %v1585
      %v1622 = vunpack.c.l.b16 %v1586
      %v1623 = vunpack.c.l.b16 %v1587
      %v1624 = vpack.c.b16 %v1608, %v1607
      %v1625 = vpack.c.b16 %v1610, %v1609
      %v1626 = vpack.c.b16 %v1612, %v1611
      %v1627 = vpack.c.b16 %v1614, %v1613
      %v1628 = vpack.c.b16 %v1616, %v1615
      %v1629 = vpack.c.b16 %v1618, %v1617
      %v1630 = vpack.c.b16 %v1620, %v1619
      %v1631 = vpack.c.b16 %v1622, %v1621
      %v1632 = vpack.c.b16 %v1623, %v1623
      %v1634 = vshrl.u32 %v1624, 16
      %v1636 = vshll.u32 %v1624, 16
      %v1638 = vrot.slane %v1636, 1
      %v1639 = vor.u32 %v1634, %v1638
      %v1641 = vshll.u32 %v1625, 16
      %v1643 = vrot.slane %v1641, 1
      %v1644 = vsel %vm930, %v1639, %v1643
      %v1645 = vshrl.u32 %v1625, 16
      %v1647 = vor.u32 %v1645, %v1643
      %v1649 = vshll.u32 %v1626, 16
      %v1651 = vrot.slane %v1649, 1
      %v1652 = vsel %vm930, %v1647, %v1651
      %v1653 = vshrl.u32 %v1626, 16
      %v1655 = vor.u32 %v1653, %v1651
      %v1657 = vshll.u32 %v1627, 16
      %v1659 = vrot.slane %v1657, 1
      %v1660 = vsel %vm930, %v1655, %v1659
      %v1661 = vshrl.u32 %v1627, 16
      %v1663 = vor.u32 %v1661, %v1659
      %v1665 = vshll.u32 %v1628, 16
      %v1667 = vrot.slane %v1665, 1
      %v1668 = vsel %vm930, %v1663, %v1667
      %v1669 = vshrl.u32 %v1628, 16
      %v1671 = vor.u32 %v1669, %v1667
      %v1673 = vshll.u32 %v1629, 16
      %v1675 = vrot.slane %v1673, 1
      %v1676 = vsel %vm930, %v1671, %v1675
      %v1677 = vshrl.u32 %v1629, 16
      %v1679 = vor.u32 %v1677, %v1675
      %v1681 = vshll.u32 %v1630, 16
      %v1683 = vrot.slane %v1681, 1
      %v1684 = vsel %vm930, %v1679, %v1683
      %v1685 = vshrl.u32 %v1630, 16
      %v1687 = vor.u32 %v1685, %v1683
      %v1689 = vshll.u32 %v1631, 16
      %v1691 = vrot.slane %v1689, 1
      %v1692 = vsel %vm930, %v1687, %v1691
      %v1693 = vshrl.u32 %v1631, 16
      %v1695 = vor.u32 %v1693, %v1691
      %v1697 = vshll.u32 %v1632, 16
      %v1699 = vrot.slane %v1697, 1
      %v1700 = vsel %vm930, %v1695, %v1699
      %v1702 = vsel %vm526, %v1644, 0
      %v1705 = vsel %vm526, %v1652, 0
      %v1708 = vsel %vm526, %v1660, 0
      %v1711 = vsel %vm526, %v1668, 0
      %v1714 = vsel %vm526, %v1676, 0
      %v1717 = vsel %vm526, %v1684, 0
      %v1720 = vsel %vm526, %v1692, 0
      %v1723 = vsel %vm526, %v1700, 0
      %v1726 = vsel %vm551, %v1589, 0
      %1728 = vmatprep.subr.bf16.mxu0 0
      %1729 = vmatpush1.bf16.msra.mxu0 %v1726
      %1730 = vmatprep.subr.bf16.mxu0 0
      %1731 = vmatpush1.bf16.msra.mxu0 0
      %1732 = vmatprep.subr.bf16.mxu0 0
      %1733 = vmatpush1.bf16.msra.mxu0 0
      %1734 = vmatprep.subr.bf16.mxu0 0
      %1735 = vmatpush1.bf16.msra.mxu0 0
      %1736 = vmatprep.subr.bf16.mxu0 0
      %1737 = vmatpush1.bf16.msra.mxu0 0
      %1738 = vmatprep.subr.bf16.mxu0 0
      %1739 = vmatpush1.bf16.msra.mxu0 0
      %1740 = vmatprep.subr.bf16.mxu0 0
      %1741 = vmatpush1.bf16.msra.mxu0 0
      %1742 = vmatprep.subr.bf16.mxu0 0
      %1743 = vmatpush1.bf16.msra.mxu0 0
      %1744 = vmatprep.subr.bf16.mxu0 0
      %1745 = vmatpush1.bf16.msra.mxu0 0
      %1746 = vmatprep.subr.bf16.mxu0 0
      %1747 = vmatpush1.bf16.msra.mxu0 0
      %1748 = vmatprep.subr.bf16.mxu0 0
      %1749 = vmatpush1.bf16.msra.mxu0 0
      %1750 = vmatprep.subr.bf16.mxu0 0
      %1751 = vmatpush1.bf16.msra.mxu0 0
      %1752 = vmatprep.subr.bf16.mxu0 0
      %1753 = vmatpush1.bf16.msra.mxu0 0
      %1754 = vmatprep.subr.bf16.mxu0 0
      %1755 = vmatpush1.bf16.msra.mxu0 0
      %1756 = vmatprep.subr.bf16.mxu0 0
      %1757 = vmatpush1.bf16.msra.mxu0 0
      %1758 = vmatprep.subr.bf16.mxu0 0
      %1759 = vmatpush1.bf16.msra.mxu0 0
      %1760 = vmatprep.mubr.bf16.mxu0 0
      %1761 = vmatmul.mubr.bf16.gmra.mrb[0].mxu0 %v1702
      %v1762 = vpop.f32.mrb[0].mxu0
      %v1763 = vadd.f32 0.0, %v1762
      %v1764 = vpop.f32.mrb[0].mxu0
      %v1765 = vpop.f32.mrb[0].mxu0
      %v1766 = vadd.f32 0.0, %v1765
      %v1767 = vpop.f32.mrb[0].mxu0
      %1768 = vmatprep.mubr.bf16.mxu0 0
      %1769 = vmatmul.mubr.bf16.gmra.mrb[0].mxu0 %v1705
      %v1770 = vpop.f32.mrb[0].mxu0
      %v1771 = vadd.f32 0.0, %v1770
      %v1772 = vpop.f32.mrb[0].mxu0
      %v1773 = vpop.f32.mrb[0].mxu0
      %v1774 = vadd.f32 0.0, %v1773
      %v1775 = vpop.f32.mrb[0].mxu0
      %1776 = vmatprep.mubr.bf16.mxu0 0
      %1777 = vmatmul.mubr.bf16.gmra.mrb[0].mxu0 %v1708
      %v1778 = vpop.f32.mrb[0].mxu0
      %v1779 = vadd.f32 0.0, %v1778
      %v1780 = vpop.f32.mrb[0].mxu0
      %v1781 = vpop.f32.mrb[0].mxu0
      %v1782 = vadd.f32 0.0, %v1781
      %v1783 = vpop.f32.mrb[0].mxu0
      %1784 = vmatprep.mubr.bf16.mxu0 0
      %1785 = vmatmul.mubr.bf16.gmra.mrb[0].mxu0 %v1711
      %v1786 = vpop.f32.mrb[0].mxu0
      %v1787 = vadd.f32 0.0, %v1786
      %v1788 = vpop.f32.mrb[0].mxu0
      %v1789 = vpop.f32.mrb[0].mxu0
      %v1790 = vadd.f32 0.0, %v1789
      %v1791 = vpop.f32.mrb[0].mxu0
      %1792 = vmatprep.mubr.bf16.mxu0 0
      %1793 = vmatmul.mubr.bf16.gmra.mrb[0].mxu0 %v1714
      %v1794 = vpop.f32.mrb[0].mxu0
      %v1795 = vadd.f32 0.0, %v1794
      %v1796 = vpop.f32.mrb[0].mxu0
      %v1797 = vpop.f32.mrb[0].mxu0
      %v1798 = vadd.f32 0.0, %v1797
      %v1799 = vpop.f32.mrb[0].mxu0
      %1800 = vmatprep.mubr.bf16.mxu0 0
      %1801 = vmatmul.mubr.bf16.gmra.mrb[0].mxu0 %v1717
      %v1802 = vpop.f32.mrb[0].mxu0
      %v1803 = vadd.f32 0.0, %v1802
      %v1804 = vpop.f32.mrb[0].mxu0
      %v1805 = vpop.f32.mrb[0].mxu0
      %v1806 = vadd.f32 0.0, %v1805
      %v1807 = vpop.f32.mrb[0].mxu0
      %1808 = vmatprep.mubr.bf16.mxu0 0
      %1809 = vmatmul.mubr.bf16.gmra.mrb[0].mxu0 %v1720
      %v1810 = vpop.f32.mrb[0].mxu0
      %v1811 = vadd.f32 0.0, %v1810
      %v1812 = vpop.f32.mrb[0].mxu0
      %v1813 = vpop.f32.mrb[0].mxu0
      %v1814 = vadd.f32 0.0, %v1813
      %v1815 = vpop.f32.mrb[0].mxu0
      %1816 = vmatprep.mubr.bf16.mxu0 0
      %1817 = vmatmul.mubr.bf16.gmra.mrb[0].mxu0 %v1723
      %v1818 = vpop.f32.mrb[0].mxu0
      %v1819 = vadd.f32 0.0, %v1818
      %v1820 = vpop.f32.mrb[0].mxu0
      %v1821 = vpop.f32.mrb[0].mxu0
      %v1822 = vadd.f32 0.0, %v1821
      %v1823 = vpop.f32.mrb[0].mxu0
      %1824 = vdwg.mxu0
      %v1825 = vadd.f32 %v1555, %v1763
      %v1826 = vadd.f32 %v1556, %v1766
      %v1827 = vadd.f32 %v1557, %v1771
      %v1828 = vadd.f32 %v1558, %v1774
      %v1829 = vadd.f32 %v1559, %v1779
      %v1830 = vadd.f32 %v1560, %v1782
      %v1831 = vadd.f32 %v1561, %v1787
      %v1832 = vadd.f32 %v1562, %v1790
      %v1833 = vadd.f32 %v1563, %v1795
      %v1834 = vadd.f32 %v1564, %v1798
      %v1835 = vadd.f32 %v1565, %v1803
      %v1836 = vadd.f32 %v1566, %v1806
      %v1837 = vadd.f32 %v1567, %v1811
      %v1838 = vadd.f32 %v1568, %v1814
      %v1839 = vadd.f32 %v1569, %v1819
      %v1840 = vadd.f32 %v1570, %v1822
      %v1841 = vld [vmem:[%s206 + $0x14] sm:$0x8]
      %v1842 = vld [vmem:[%s206 + $0x18] sm:$0xf]
      %v1843 = vld [vmem:[%s206 + $0x1c] sm:$0xf]
      %v1844 = vld [vmem:[%s206 + $0x20] sm:$0xf]
      %v1845 = vld [vmem:[%s206 + $0x24] sm:$0xf]
      %v1846 = vld [vmem:[%s206 + $0x28] sm:$0xf]
      %v1847 = vld [vmem:[%s206 + $0x2c] sm:$0xf]
      %v1848 = vld [vmem:[%s206 + $0x30] sm:$0xf]
      %v1849 = vld [vmem:[%s206 + $0x34] sm:$0xf]
      %v1850 = vld [vmem:[%s206 + $0x38] sm:$0xf]
      %v1851 = vld [vmem:[%s206 + $0x3c] sm:$0xf]
      %v1852 = vld [vmem:[%s206 + $0x40] sm:$0xf]
      %v1853 = vld [vmem:[%s206 + $0x44] sm:$0xf]
      %v1854 = vld [vmem:[%s206 + $0x48] sm:$0xf]
      %v1855 = vld [vmem:[%s206 + $0x4c] sm:$0xf]
      %v1856 = vld [vmem:[%s206 + $0x50] sm:$0xf]
      %v1857 = vld [vmem:[%s206 + $0x54] sm:$0xf]
      %s1858 = scalar_lea.vmem %s210, 24
      %v1859 = vld [vmem:[%s1858] sm:$0xf]
      %v1877 = vunpack.c.l.b16 %v1841
      %v1878 = vunpack.c.l.b16 %v1842
      %v1879 = vunpack.c.l.b16 %v1843
      %v1880 = vunpack.c.l.b16 %v1844
      %v1881 = vunpack.c.l.b16 %v1845
      %v1882 = vunpack.c.l.b16 %v1846
      %v1883 = vunpack.c.l.b16 %v1847
      %v1884 = vunpack.c.l.b16 %v1848
      %v1885 = vunpack.c.l.b16 %v1849
      %v1886 = vunpack.c.l.b16 %v1850
      %v1887 = vunpack.c.l.b16 %v1851
      %v1888 = vunpack.c.l.b16 %v1852
      %v1889 = vunpack.c.l.b16 %v1853
      %v1890 = vunpack.c.l.b16 %v1854
      %v1891 = vunpack.c.l.b16 %v1855
      %v1892 = vunpack.c.l.b16 %v1856
      %v1893 = vunpack.c.l.b16 %v1857
      %v1894 = vpack.c.b16 %v1878, %v1877
      %v1895 = vpack.c.b16 %v1880, %v1879
      %v1896 = vpack.c.b16 %v1882, %v1881
      %v1897 = vpack.c.b16 %v1884, %v1883
      %v1898 = vpack.c.b16 %v1886, %v1885
      %v1899 = vpack.c.b16 %v1888, %v1887
      %v1900 = vpack.c.b16 %v1890, %v1889
      %v1901 = vpack.c.b16 %v1892, %v1891
      %v1902 = vpack.c.b16 %v1893, %v1893
      %v1904 = vshrl.u32 %v1894, 16
      %v1906 = vrot.slane %v1904, 3
      %v1907 = vshll.u32 %v1894, 16
      %v1909 = vrot.slane %v1907, 4
      %v1910 = vor.u32 %v1906, %v1909
      %v1912 = vshrl.u32 %v1895, 16
      %v1914 = vrot.slane %v1912, 3
      %v1915 = vshll.u32 %v1895, 16
      %v1917 = vrot.slane %v1915, 4
      %v1918 = vor.u32 %v1914, %v1917
      %v1919 = vsel %vm663, %v1910, %v1918
      %v1921 = vshrl.u32 %v1896, 16
      %v1923 = vrot.slane %v1921, 3
      %v1924 = vshll.u32 %v1896, 16
      %v1926 = vrot.slane %v1924, 4
      %v1927 = vor.u32 %v1923, %v1926
      %v1928 = vsel %vm663, %v1918, %v1927
      %v1930 = vshrl.u32 %v1897, 16
      %v1932 = vrot.slane %v1930, 3
      %v1933 = vshll.u32 %v1897, 16
      %v1935 = vrot.slane %v1933, 4
      %v1936 = vor.u32 %v1932, %v1935
      %v1937 = vsel %vm663, %v1927, %v1936
      %v1939 = vshrl.u32 %v1898, 16
      %v1941 = vrot.slane %v1939, 3
      %v1942 = vshll.u32 %v1898, 16
      %v1944 = vrot.slane %v1942, 4
      %v1945 = vor.u32 %v1941, %v1944
      %v1946 = vsel %vm663, %v1936, %v1945
      %v1948 = vshrl.u32 %v1899, 16
      %v1950 = vrot.slane %v1948, 3
      %v1951 = vshll.u32 %v1899, 16
      %v1953 = vrot.slane %v1951, 4
      %v1954 = vor.u32 %v1950, %v1953
      %v1955 = vsel %vm663, %v1945, %v1954
      %v1957 = vshrl.u32 %v1900, 16
      %v1959 = vrot.slane %v1957, 3
      %v1960 = vshll.u32 %v1900, 16
      %v1962 = vrot.slane %v1960, 4
      %v1963 = vor.u32 %v1959, %v1962
      %v1964 = vsel %vm663, %v1954, %v1963
      %v1966 = vshrl.u32 %v1901, 16
      %v1968 = vrot.slane %v1966, 3
      %v1969 = vshll.u32 %v1901, 16
      %v1971 = vrot.slane %v1969, 4
      %v1972 = vor.u32 %v1968, %v1971
      %v1973 = vsel %vm663, %v1963, %v1972
      %v1975 = vshrl.u32 %v1902, 16
      %v1977 = vrot.slane %v1975, 3
      %v1978 = vshll.u32 %v1902, 16
      %v1980 = vrot.slane %v1978, 4
      %v1981 = vor.u32 %v1977, %v1980
      %v1982 = vsel %vm663, %v1972, %v1981
      %v1984 = vsel %vm526, %v1919, 0
      %v1987 = vsel %vm526, %v1928, 0
      %v1990 = vsel %vm526, %v1937, 0
      %v1993 = vsel %vm526, %v1946, 0
      %v1996 = vsel %vm526, %v1955, 0
      %v1999 = vsel %vm526, %v1964, 0
      %v2002 = vsel %vm526, %v1973, 0
      %v2005 = vsel %vm526, %v1982, 0
      %v2008 = vsel %vm551, %v1859, 0
      %2010 = vmatprep.subr.bf16.mxu0 0
      %2011 = vmatpush1.bf16.msra.mxu0 %v2008
      %2012 = vmatprep.subr.bf16.mxu0 0
      %2013 = vmatpush1.bf16.msra.mxu0 0
      %2014 = vmatprep.subr.bf16.mxu0 0
      %2015 = vmatpush1.bf16.msra.mxu0 0
      %2016 = vmatprep.subr.bf16.mxu0 0
      %2017 = vmatpush1.bf16.msra.mxu0 0
      %2018 = vmatprep.subr.bf16.mxu0 0
      %2019 = vmatpush1.bf16.msra.mxu0 0
      %2020 = vmatprep.subr.bf16.mxu0 0
      %2021 = vmatpush1.bf16.msra.mxu0 0
      %2022 = vmatprep.subr.bf16.mxu0 0
      %2023 = vmatpush1.bf16.msra.mxu0 0
      %2024 = vmatprep.subr.bf16.mxu0 0
      %2025 = vmatpush1.bf16.msra.mxu0 0
      %2026 = vmatprep.subr.bf16.mxu0 0
      %2027 = vmatpush1.bf16.msra.mxu0 0
      %2028 = vmatprep.subr.bf16.mxu0 0
      %2029 = vmatpush1.bf16.msra.mxu0 0
      %2030 = vmatprep.subr.bf16.mxu0 0
      %2031 = vmatpush1.bf16.msra.mxu0 0
      %2032 = vmatprep.subr.bf16.mxu0 0
      %2033 = vmatpush1.bf16.msra.mxu0 0
      %2034 = vmatprep.subr.bf16.mxu0 0
      %2035 = vmatpush1.bf16.msra.mxu0 0
      %2036 = vmatprep.subr.bf16.mxu0 0
      %2037 = vmatpush1.bf16.msra.mxu0 0
      %2038 = vmatprep.subr.bf16.mxu0 0
      %2039 = vmatpush1.bf16.msra.mxu0 0
      %2040 = vmatprep.subr.bf16.mxu0 0
      %2041 = vmatpush1.bf16.msra.mxu0 0
      %2042 = vmatprep.mubr.bf16.mxu0 0
      %2043 = vmatmul.mubr.bf16.gmra.mrb[0].mxu0 %v1984
      %v2044 = vpop.f32.mrb[0].mxu0
      %v2045 = vadd.f32 0.0, %v2044
      %v2046 = vpop.f32.mrb[0].mxu0
      %v2047 = vpop.f32.mrb[0].mxu0
      %v2048 = vadd.f32 0.0, %v2047
      %v2049 = vpop.f32.mrb[0].mxu0
      %2050 = vmatprep.mubr.bf16.mxu0 0
      %2051 = vmatmul.mubr.bf16.gmra.mrb[0].mxu0 %v1987
      %v2052 = vpop.f32.mrb[0].mxu0
      %v2053 = vadd.f32 0.0, %v2052
      %v2054 = vpop.f32.mrb[0].mxu0
      %v2055 = vpop.f32.mrb[0].mxu0
      %v2056 = vadd.f32 0.0, %v2055
      %v2057 = vpop.f32.mrb[0].mxu0
      %2058 = vmatprep.mubr.bf16.mxu0 0
      %2059 = vmatmul.mubr.bf16.gmra.mrb[0].mxu0 %v1990
      %v2060 = vpop.f32.mrb[0].mxu0
      %v2061 = vadd.f32 0.0, %v2060
      %v2062 = vpop.f32.mrb[0].mxu0
      %v2063 = vpop.f32.mrb[0].mxu0
      %v2064 = vadd.f32 0.0, %v2063
      %v2065 = vpop.f32.mrb[0].mxu0
      %2066 = vmatprep.mubr.bf16.mxu0 0
      %2067 = vmatmul.mubr.bf16.gmra.mrb[0].mxu0 %v1993
      %v2068 = vpop.f32.mrb[0].mxu0
      %v2069 = vadd.f32 0.0, %v2068
      %v2070 = vpop.f32.mrb[0].mxu0
      %v2071 = vpop.f32.mrb[0].mxu0
      %v2072 = vadd.f32 0.0, %v2071
      %v2073 = vpop.f32.mrb[0].mxu0
      %2074 = vmatprep.mubr.bf16.mxu0 0
      %2075 = vmatmul.mubr.bf16.gmra.mrb[0].mxu0 %v1996
      %v2076 = vpop.f32.mrb[0].mxu0
      %v2077 = vadd.f32 0.0, %v2076
      %v2078 = vpop.f32.mrb[0].mxu0
      %v2079 = vpop.f32.mrb[0].mxu0
      %v2080 = vadd.f32 0.0, %v2079
      %v2081 = vpop.f32.mrb[0].mxu0
      %2082 = vmatprep.mubr.bf16.mxu0 0
      %2083 = vmatmul.mubr.bf16.gmra.mrb[0].mxu0 %v1999
      %v2084 = vpop.f32.mrb[0].mxu0
      %v2085 = vadd.f32 0.0, %v2084
      %v2086 = vpop.f32.mrb[0].mxu0
      %v2087 = vpop.f32.mrb[0].mxu0
      %v2088 = vadd.f32 0.0, %v2087
      %v2089 = vpop.f32.mrb[0].mxu0
      %2090 = vmatprep.mubr.bf16.mxu0 0
      %2091 = vmatmul.mubr.bf16.gmra.mrb[0].mxu0 %v2002
      %v2092 = vpop.f32.mrb[0].mxu0
      %v2093 = vadd.f32 0.0, %v2092
      %v2094 = vpop.f32.mrb[0].mxu0
      %v2095 = vpop.f32.mrb[0].mxu0
      %v2096 = vadd.f32 0.0, %v2095
      %v2097 = vpop.f32.mrb[0].mxu0
      %2098 = vmatprep.mubr.bf16.mxu0 0
      %2099 = vmatmul.mubr.bf16.gmra.mrb[0].mxu0 %v2005
      %v2100 = vpop.f32.mrb[0].mxu0
      %v2101 = vadd.f32 0.0, %v2100
      %v2102 = vpop.f32.mrb[0].mxu0
      %v2103 = vpop.f32.mrb[0].mxu0
      %v2104 = vadd.f32 0.0, %v2103
      %v2105 = vpop.f32.mrb[0].mxu0
      %2106 = vdwg.mxu0
      %v2107 = vadd.f32 %v1825, %v2045
      %v2108 = vadd.f32 %v1826, %v2048
      %v2109 = vadd.f32 %v1827, %v2053
      %v2110 = vadd.f32 %v1828, %v2056
      %v2111 = vadd.f32 %v1829, %v2061
      %v2112 = vadd.f32 %v1830, %v2064
      %v2113 = vadd.f32 %v1831, %v2069
      %v2114 = vadd.f32 %v1832, %v2072
      %v2115 = vadd.f32 %v1833, %v2077
      %v2116 = vadd.f32 %v1834, %v2080
      %v2117 = vadd.f32 %v1835, %v2085
      %v2118 = vadd.f32 %v1836, %v2088
      %v2119 = vadd.f32 %v1837, %v2093
      %v2120 = vadd.f32 %v1838, %v2096
      %v2121 = vadd.f32 %v1839, %v2101
      %v2122 = vadd.f32 %v1840, %v2104
      %s2123 = scalar_lea.vmem %s210, 28
      %v2124 = vld [vmem:[%s2123] sm:$0xf]
      %v2125 = vpack.c.b16 %v1879, %v1878
      %v2126 = vpack.c.b16 %v1881, %v1880
      %v2127 = vpack.c.b16 %v1883, %v1882
      %v2128 = vpack.c.b16 %v1885, %v1884
      %v2129 = vpack.c.b16 %v1887, %v1886
      %v2130 = vpack.c.b16 %v1889, %v1888
      %v2131 = vpack.c.b16 %v1891, %v1890
      %v2132 = vpack.c.b16 %v1893, %v1892
      %v2134 = vsel %vm526, %v2125, 0
      %v2137 = vsel %vm526, %v2126, 0
      %v2140 = vsel %vm526, %v2127, 0
      %v2143 = vsel %vm526, %v2128, 0
      %v2146 = vsel %vm526, %v2129, 0
      %v2149 = vsel %vm526, %v2130, 0
      %v2152 = vsel %vm526, %v2131, 0
      %v2155 = vsel %vm526, %v2132, 0
      %v2158 = vsel %vm551, %v2124, 0
      %2160 = vmatprep.subr.bf16.mxu0 0
      %2161 = vmatpush1.bf16.msra.mxu0 %v2158
      %2162 = vmatprep.subr.bf16.mxu0 0
      %2163 = vmatpush1.bf16.msra.mxu0 0
      %2164 = vmatprep.subr.bf16.mxu0 0
      %2165 = vmatpush1.bf16.msra.mxu0 0
      %2166 = vmatprep.subr.bf16.mxu0 0
      %2167 = vmatpush1.bf16.msra.mxu0 0
      %2168 = vmatprep.subr.bf16.mxu0 0
      %2169 = vmatpush1.bf16.msra.mxu0 0
      %2170 = vmatprep.subr.bf16.mxu0 0
      %2171 = vmatpush1.bf16.msra.mxu0 0
      %2172 = vmatprep.subr.bf16.mxu0 0
      %2173 = vmatpush1.bf16.msra.mxu0 0
      %2174 = vmatprep.subr.bf16.mxu0 0
      %2175 = vmatpush1.bf16.msra.mxu0 0
      %2176 = vmatprep.subr.bf16.mxu0 0
      %2177 = vmatpush1.bf16.msra.mxu0 0
      %2178 = vmatprep.subr.bf16.mxu0 0
      %2179 = vmatpush1.bf16.msra.mxu0 0
      %2180 = vmatprep.subr.bf16.mxu0 0
      %2181 = vmatpush1.bf16.msra.mxu0 0
      %2182 = vmatprep.subr.bf16.mxu0 0
      %2183 = vmatpush1.bf16.msra.mxu0 0
      %2184 = vmatprep.subr.bf16.mxu0 0
      %2185 = vmatpush1.bf16.msra.mxu0 0
      %2186 = vmatprep.subr.bf16.mxu0 0
      %2187 = vmatpush1.bf16.msra.mxu0 0
      %2188 = vmatprep.subr.bf16.mxu0 0
      %2189 = vmatpush1.bf16.msra.mxu0 0
      %2190 = vmatprep.subr.bf16.mxu0 0
      %2191 = vmatpush1.bf16.msra.mxu0 0
      %2192 = vmatprep.mubr.bf16.mxu0 0
      %2193 = vmatmul.mubr.bf16.gmra.mrb[0].mxu0 %v2134
      %v2194 = vpop.f32.mrb[0].mxu0
      %v2195 = vadd.f32 0.0, %v2194
      %v2196 = vpop.f32.mrb[0].mxu0
      %v2197 = vpop.f32.mrb[0].mxu0
      %v2198 = vadd.f32 0.0, %v2197
      %v2199 = vpop.f32.mrb[0].mxu0
      %2200 = vmatprep.mubr.bf16.mxu0 0
      %2201 = vmatmul.mubr.bf16.gmra.mrb[0].mxu0 %v2137
      %v2202 = vpop.f32.mrb[0].mxu0
      %v2203 = vadd.f32 0.0, %v2202
      %v2204 = vpop.f32.mrb[0].mxu0
      %v2205 = vpop.f32.mrb[0].mxu0
      %v2206 = vadd.f32 0.0, %v2205
      %v2207 = vpop.f32.mrb[0].mxu0
      %2208 = vmatprep.mubr.bf16.mxu0 0
      %2209 = vmatmul.mubr.bf16.gmra.mrb[0].mxu0 %v2140
      %v2210 = vpop.f32.mrb[0].mxu0
      %v2211 = vadd.f32 0.0, %v2210
      %v2212 = vpop.f32.mrb[0].mxu0
      %v2213 = vpop.f32.mrb[0].mxu0
      %v2214 = vadd.f32 0.0, %v2213
      %v2215 = vpop.f32.mrb[0].mxu0
      %2216 = vmatprep.mubr.bf16.mxu0 0
      %2217 = vmatmul.mubr.bf16.gmra.mrb[0].mxu0 %v2143
      %v2218 = vpop.f32.mrb[0].mxu0
      %v2219 = vadd.f32 0.0, %v2218
      %v2220 = vpop.f32.mrb[0].mxu0
      %v2221 = vpop.f32.mrb[0].mxu0
      %v2222 = vadd.f32 0.0, %v2221
      %v2223 = vpop.f32.mrb[0].mxu0
      %2224 = vmatprep.mubr.bf16.mxu0 0
      %2225 = vmatmul.mubr.bf16.gmra.mrb[0].mxu0 %v2146
      %v2226 = vpop.f32.mrb[0].mxu0
      %v2227 = vadd.f32 0.0, %v2226
      %v2228 = vpop.f32.mrb[0].mxu0
      %v2229 = vpop.f32.mrb[0].mxu0
      %v2230 = vadd.f32 0.0, %v2229
      %v2231 = vpop.f32.mrb[0].mxu0
      %2232 = vmatprep.mubr.bf16.mxu0 0
      %2233 = vmatmul.mubr.bf16.gmra.mrb[0].mxu0 %v2149
      %v2234 = vpop.f32.mrb[0].mxu0
      %v2235 = vadd.f32 0.0, %v2234
      %v2236 = vpop.f32.mrb[0].mxu0
      %v2237 = vpop.f32.mrb[0].mxu0
      %v2238 = vadd.f32 0.0, %v2237
      %v2239 = vpop.f32.mrb[0].mxu0
      %2240 = vmatprep.mubr.bf16.mxu0 0
      %2241 = vmatmul.mubr.bf16.gmra.mrb[0].mxu0 %v2152
      %v2242 = vpop.f32.mrb[0].mxu0
      %v2243 = vadd.f32 0.0, %v2242
      %v2244 = vpop.f32.mrb[0].mxu0
      %v2245 = vpop.f32.mrb[0].mxu0
      %v2246 = vadd.f32 0.0, %v2245
      %v2247 = vpop.f32.mrb[0].mxu0
      %2248 = vmatprep.mubr.bf16.mxu0 0
      %2249 = vmatmul.mubr.bf16.gmra.mrb[0].mxu0 %v2155
      %v2250 = vpop.f32.mrb[0].mxu0
      %v2251 = vadd.f32 0.0, %v2250
      %v2252 = vpop.f32.mrb[0].mxu0
      %v2253 = vpop.f32.mrb[0].mxu0
      %v2254 = vadd.f32 0.0, %v2253
      %v2255 = vpop.f32.mrb[0].mxu0
      %2256 = vdwg.mxu0
      %v2257 = vadd.f32 %v2107, %v2195
      %v2258 = vadd.f32 %v2108, %v2198
      %v2259 = vadd.f32 %v2109, %v2203
      %v2260 = vadd.f32 %v2110, %v2206
      %v2261 = vadd.f32 %v2111, %v2211
      %v2262 = vadd.f32 %v2112, %v2214
      %v2263 = vadd.f32 %v2113, %v2219
      %v2264 = vadd.f32 %v2114, %v2222
      %v2265 = vadd.f32 %v2115, %v2227
      %v2266 = vadd.f32 %v2116, %v2230
      %v2267 = vadd.f32 %v2117, %v2235
      %v2268 = vadd.f32 %v2118, %v2238
      %v2269 = vadd.f32 %v2119, %v2243
      %v2270 = vadd.f32 %v2120, %v2246
      %v2271 = vadd.f32 %v2121, %v2251
      %v2272 = vadd.f32 %v2122, %v2254
      %v2273 = vld [vmem:[%s206 + $0x18] sm:$0xf]
      %v2274 = vld [vmem:[%s206 + $0x1c] sm:$0xf]
      %v2275 = vld [vmem:[%s206 + $0x20] sm:$0xf]
      %v2276 = vld [vmem:[%s206 + $0x24] sm:$0xf]
      %v2277 = vld [vmem:[%s206 + $0x28] sm:$0xf]
      %v2278 = vld [vmem:[%s206 + $0x2c] sm:$0xf]
      %v2279 = vld [vmem:[%s206 + $0x30] sm:$0xf]
      %v2280 = vld [vmem:[%s206 + $0x34] sm:$0xf]
      %v2281 = vld [vmem:[%s206 + $0x38] sm:$0xf]
      %v2282 = vld [vmem:[%s206 + $0x3c] sm:$0xf]
      %v2283 = vld [vmem:[%s206 + $0x40] sm:$0xf]
      %v2284 = vld [vmem:[%s206 + $0x44] sm:$0xf]
      %v2285 = vld [vmem:[%s206 + $0x48] sm:$0xf]
      %v2286 = vld [vmem:[%s206 + $0x4c] sm:$0xf]
      %v2287 = vld [vmem:[%s206 + $0x50] sm:$0xf]
      %v2288 = vld [vmem:[%s206 + $0x54] sm:$0xf]
      %v2289 = vld [vmem:[%s206 + $0x58] sm:$0x1]
      %s2290 = scalar_lea.vmem %s210, 32
      %v2291 = vld [vmem:[%s2290] sm:$0xf]
      %v2309 = vunpack.c.l.b16 %v2273
      %v2310 = vunpack.c.l.b16 %v2274
      %v2311 = vunpack.c.l.b16 %v2275
      %v2312 = vunpack.c.l.b16 %v2276
      %v2313 = vunpack.c.l.b16 %v2277
      %v2314 = vunpack.c.l.b16 %v2278
      %v2315 = vunpack.c.l.b16 %v2279
      %v2316 = vunpack.c.l.b16 %v2280
      %v2317 = vunpack.c.l.b16 %v2281
      %v2318 = vunpack.c.l.b16 %v2282
      %v2319 = vunpack.c.l.b16 %v2283
      %v2320 = vunpack.c.l.b16 %v2284
      %v2321 = vunpack.c.l.b16 %v2285
      %v2322 = vunpack.c.l.b16 %v2286
      %v2323 = vunpack.c.l.b16 %v2287
      %v2324 = vunpack.c.l.b16 %v2288
      %v2325 = vunpack.c.l.b16 %v2289
      %v2326 = vpack.c.b16 %v2310, %v2309
      %v2327 = vpack.c.b16 %v2312, %v2311
      %v2328 = vpack.c.b16 %v2314, %v2313
      %v2329 = vpack.c.b16 %v2316, %v2315
      %v2330 = vpack.c.b16 %v2318, %v2317
      %v2331 = vpack.c.b16 %v2320, %v2319
      %v2332 = vpack.c.b16 %v2322, %v2321
      %v2333 = vpack.c.b16 %v2324, %v2323
      %v2334 = vpack.c.b16 %v2325, %v2325
      %v2336 = vshrl.u32 %v2326, 16
      %v2338 = vshll.u32 %v2326, 16
      %v2340 = vrot.slane %v2338, 1
      %v2341 = vor.u32 %v2336, %v2340
      %v2343 = vshll.u32 %v2327, 16
      %v2345 = vrot.slane %v2343, 1
      %v2346 = vsel %vm930, %v2341, %v2345
      %v2347 = vshrl.u32 %v2327, 16
      %v2349 = vor.u32 %v2347, %v2345
      %v2351 = vshll.u32 %v2328, 16
      %v2353 = vrot.slane %v2351, 1
      %v2354 = vsel %vm930, %v2349, %v2353
      %v2355 = vshrl.u32 %v2328, 16
      %v2357 = vor.u32 %v2355, %v2353
      %v2359 = vshll.u32 %v2329, 16
      %v2361 = vrot.slane %v2359, 1
      %v2362 = vsel %vm930, %v2357, %v2361
      %v2363 = vshrl.u32 %v2329, 16
      %v2365 = vor.u32 %v2363, %v2361
      %v2367 = vshll.u32 %v2330, 16
      %v2369 = vrot.slane %v2367, 1
      %v2370 = vsel %vm930, %v2365, %v2369
      %v2371 = vshrl.u32 %v2330, 16
      %v2373 = vor.u32 %v2371, %v2369
      %v2375 = vshll.u32 %v2331, 16
      %v2377 = vrot.slane %v2375, 1
      %v2378 = vsel %vm930, %v2373, %v2377
      %v2379 = vshrl.u32 %v2331, 16
      %v2381 = vor.u32 %v2379, %v2377
      %v2383 = vshll.u32 %v2332, 16
      %v2385 = vrot.slane %v2383, 1
      %v2386 = vsel %vm930, %v2381, %v2385
      %v2387 = vshrl.u32 %v2332, 16
      %v2389 = vor.u32 %v2387, %v2385
      %v2391 = vshll.u32 %v2333, 16
      %v2393 = vrot.slane %v2391, 1
      %v2394 = vsel %vm930, %v2389, %v2393
      %v2395 = vshrl.u32 %v2333, 16
      %v2397 = vor.u32 %v2395, %v2393
      %v2399 = vshll.u32 %v2334, 16
      %v2401 = vrot.slane %v2399, 1
      %v2402 = vsel %vm930, %v2397, %v2401
      %v2404 = vsel %vm526, %v2346, 0
      %v2407 = vsel %vm526, %v2354, 0
      %v2410 = vsel %vm526, %v2362, 0
      %v2413 = vsel %vm526, %v2370, 0
      %v2416 = vsel %vm526, %v2378, 0
      %v2419 = vsel %vm526, %v2386, 0
      %v2422 = vsel %vm526, %v2394, 0
      %v2425 = vsel %vm526, %v2402, 0
      %v2428 = vsel %vm551, %v2291, 0
      %2430 = vmatprep.subr.bf16.mxu0 0
      %2431 = vmatpush1.bf16.msra.mxu0 %v2428
      %2432 = vmatprep.subr.bf16.mxu0 0
      %2433 = vmatpush1.bf16.msra.mxu0 0
      %2434 = vmatprep.subr.bf16.mxu0 0
      %2435 = vmatpush1.bf16.msra.mxu0 0
      %2436 = vmatprep.subr.bf16.mxu0 0
      %2437 = vmatpush1.bf16.msra.mxu0 0
      %2438 = vmatprep.subr.bf16.mxu0 0
      %2439 = vmatpush1.bf16.msra.mxu0 0
      %2440 = vmatprep.subr.bf16.mxu0 0
      %2441 = vmatpush1.bf16.msra.mxu0 0
      %2442 = vmatprep.subr.bf16.mxu0 0
      %2443 = vmatpush1.bf16.msra.mxu0 0
      %2444 = vmatprep.subr.bf16.mxu0 0
      %2445 = vmatpush1.bf16.msra.mxu0 0
      %2446 = vmatprep.subr.bf16.mxu0 0
      %2447 = vmatpush1.bf16.msra.mxu0 0
      %2448 = vmatprep.subr.bf16.mxu0 0
      %2449 = vmatpush1.bf16.msra.mxu0 0
      %2450 = vmatprep.subr.bf16.mxu0 0
      %2451 = vmatpush1.bf16.msra.mxu0 0
      %2452 = vmatprep.subr.bf16.mxu0 0
      %2453 = vmatpush1.bf16.msra.mxu0 0
      %2454 = vmatprep.subr.bf16.mxu0 0
      %2455 = vmatpush1.bf16.msra.mxu0 0
      %2456 = vmatprep.subr.bf16.mxu0 0
      %2457 = vmatpush1.bf16.msra.mxu0 0
      %2458 = vmatprep.subr.bf16.mxu0 0
      %2459 = vmatpush1.bf16.msra.mxu0 0
      %2460 = vmatprep.subr.bf16.mxu0 0
      %2461 = vmatpush1.bf16.msra.mxu0 0
      %2462 = vmatprep.mubr.bf16.mxu0 0
      %2463 = vmatmul.mubr.bf16.gmra.mrb[0].mxu0 %v2404
      %v2464 = vpop.f32.mrb[0].mxu0
      %v2465 = vadd.f32 0.0, %v2464
      %v2466 = vpop.f32.mrb[0].mxu0
      %v2467 = vpop.f32.mrb[0].mxu0
      %v2468 = vadd.f32 0.0, %v2467
      %v2469 = vpop.f32.mrb[0].mxu0
      %2470 = vmatprep.mubr.bf16.mxu0 0
      %2471 = vmatmul.mubr.bf16.gmra.mrb[0].mxu0 %v2407
      %v2472 = vpop.f32.mrb[0].mxu0
      %v2473 = vadd.f32 0.0, %v2472
      %v2474 = vpop.f32.mrb[0].mxu0
      %v2475 = vpop.f32.mrb[0].mxu0
      %v2476 = vadd.f32 0.0, %v2475
      %v2477 = vpop.f32.mrb[0].mxu0
      %2478 = vmatprep.mubr.bf16.mxu0 0
      %2479 = vmatmul.mubr.bf16.gmra.mrb[0].mxu0 %v2410
      %v2480 = vpop.f32.mrb[0].mxu0
      %v2481 = vadd.f32 0.0, %v2480
      %v2482 = vpop.f32.mrb[0].mxu0
      %v2483 = vpop.f32.mrb[0].mxu0
      %v2484 = vadd.f32 0.0, %v2483
      %v2485 = vpop.f32.mrb[0].mxu0
      %2486 = vmatprep.mubr.bf16.mxu0 0
      %2487 = vmatmul.mubr.bf16.gmra.mrb[0].mxu0 %v2413
      %v2488 = vpop.f32.mrb[0].mxu0
      %v2489 = vadd.f32 0.0, %v2488
      %v2490 = vpop.f32.mrb[0].mxu0
      %v2491 = vpop.f32.mrb[0].mxu0
      %v2492 = vadd.f32 0.0, %v2491
      %v2493 = vpop.f32.mrb[0].mxu0
      %2494 = vmatprep.mubr.bf16.mxu0 0
      %2495 = vmatmul.mubr.bf16.gmra.mrb[0].mxu0 %v2416
      %v2496 = vpop.f32.mrb[0].mxu0
      %v2497 = vadd.f32 0.0, %v2496
      %v2498 = vpop.f32.mrb[0].mxu0
      %v2499 = vpop.f32.mrb[0].mxu0
      %v2500 = vadd.f32 0.0, %v2499
      %v2501 = vpop.f32.mrb[0].mxu0
      %2502 = vmatprep.mubr.bf16.mxu0 0
      %2503 = vmatmul.mubr.bf16.gmra.mrb[0].mxu0 %v2419
      %v2504 = vpop.f32.mrb[0].mxu0
      %v2505 = vadd.f32 0.0, %v2504
      %v2506 = vpop.f32.mrb[0].mxu0
      %v2507 = vpop.f32.mrb[0].mxu0
      %v2508 = vadd.f32 0.0, %v2507
      %v2509 = vpop.f32.mrb[0].mxu0
      %2510 = vmatprep.mubr.bf16.mxu0 0
      %2511 = vmatmul.mubr.bf16.gmra.mrb[0].mxu0 %v2422
      %v2512 = vpop.f32.mrb[0].mxu0
      %v2513 = vadd.f32 0.0, %v2512
      %v2514 = vpop.f32.mrb[0].mxu0
      %v2515 = vpop.f32.mrb[0].mxu0
      %v2516 = vadd.f32 0.0, %v2515
      %v2517 = vpop.f32.mrb[0].mxu0
      %2518 = vmatprep.mubr.bf16.mxu0 0
      %2519 = vmatmul.mubr.bf16.gmra.mrb[0].mxu0 %v2425
      %v2520 = vpop.f32.mrb[0].mxu0
      %v2521 = vadd.f32 0.0, %v2520
      %v2522 = vpop.f32.mrb[0].mxu0
      %v2523 = vpop.f32.mrb[0].mxu0
      %v2524 = vadd.f32 0.0, %v2523
      %v2525 = vpop.f32.mrb[0].mxu0
      %2526 = vdwg.mxu0
      %v2527 = vadd.f32 %v2257, %v2465
      %v2528 = vadd.f32 %v2258, %v2468
      %v2529 = vadd.f32 %v2259, %v2473
      %v2530 = vadd.f32 %v2260, %v2476
      %v2531 = vadd.f32 %v2261, %v2481
      %v2532 = vadd.f32 %v2262, %v2484
      %v2533 = vadd.f32 %v2263, %v2489
      %v2534 = vadd.f32 %v2264, %v2492
      %v2535 = vadd.f32 %v2265, %v2497
      %v2536 = vadd.f32 %v2266, %v2500
      %v2537 = vadd.f32 %v2267, %v2505
      %v2538 = vadd.f32 %v2268, %v2508
      %v2539 = vadd.f32 %v2269, %v2513
      %v2540 = vadd.f32 %v2270, %v2516
      %v2541 = vadd.f32 %v2271, %v2521
      %v2542 = vadd.f32 %v2272, %v2524
      %v2544 = vlaneseq
      %v2545 = vshrl.u32 %v2544, 7
      %v2546 = vsub.s32 0, %v2545
      %v2547 = vrot.slane %v465, %v2546
      %v2549 = vadd.f32 %v2527, %v2547
      %v2550 = vadd.f32 %v2528, %v2547
      %v2551 = vadd.f32 %v2529, %v2547
      %v2552 = vadd.f32 %v2530, %v2547
      %v2553 = vadd.f32 %v2531, %v2547
      %v2554 = vadd.f32 %v2532, %v2547
      %v2555 = vadd.f32 %v2533, %v2547
      %v2556 = vadd.f32 %v2534, %v2547
      %v2557 = vadd.f32 %v2535, %v2547
      %v2558 = vadd.f32 %v2536, %v2547
      %v2559 = vadd.f32 %v2537, %v2547
      %v2560 = vadd.f32 %v2538, %v2547
      %v2561 = vadd.f32 %v2539, %v2547
      %v2562 = vadd.f32 %v2540, %v2547
      %v2563 = vadd.f32 %v2541, %v2547
      %v2564 = vadd.f32 %v2542, %v2547
      %v2565 = vmax.f32 %v2549, 0.0
      %v2566 = vmax.f32 %v2550, 0.0
      %v2567 = vmax.f32 %v2551, 0.0
      %v2568 = vmax.f32 %v2552, 0.0
      %v2569 = vmax.f32 %v2553, 0.0
      %v2570 = vmax.f32 %v2554, 0.0
      %v2571 = vmax.f32 %v2555, 0.0
      %v2572 = vmax.f32 %v2556, 0.0
      %v2573 = vmax.f32 %v2557, 0.0
      %v2574 = vmax.f32 %v2558, 0.0
      %v2575 = vmax.f32 %v2559, 0.0
      %v2576 = vmax.f32 %v2560, 0.0
      %v2577 = vmax.f32 %v2561, 0.0
      %v2578 = vmax.f32 %v2562, 0.0
      %v2579 = vmax.f32 %v2563, 0.0
      %v2580 = vmax.f32 %v2564, 0.0
      %v2581 = vsel %vm449, 1, 0
      %v2582 = vsel %vm450, 1, 0
      %v2583 = vsel %vm451, 1, 0
      %v2584 = vsel %vm452, 1, 0
      %v2585 = vsel %vm453, 1, 0
      %v2586 = vsel %vm454, 1, 0
      %v2587 = vsel %vm455, 1, 0
      %v2588 = vsel %vm456, 1, 0
      %v2589 = vsel %vm457, 1, 0
      %v2590 = vsel %vm458, 1, 0
      %v2591 = vsel %vm459, 1, 0
      %v2592 = vsel %vm460, 1, 0
      %v2593 = vsel %vm461, 1, 0
      %v2594 = vsel %vm462, 1, 0
      %v2595 = vsel %vm463, 1, 0
      %v2596 = vsel %vm464, 1, 0
      %vm2597 = vcmp.eq.s32.totalorder %v2581, 1
      %vm2598 = vcmp.eq.s32.totalorder %v2582, 1
      %vm2599 = vcmp.eq.s32.totalorder %v2583, 1
      %vm2600 = vcmp.eq.s32.totalorder %v2584, 1
      %vm2601 = vcmp.eq.s32.totalorder %v2585, 1
      %vm2602 = vcmp.eq.s32.totalorder %v2586, 1
      %vm2603 = vcmp.eq.s32.totalorder %v2587, 1
      %vm2604 = vcmp.eq.s32.totalorder %v2588, 1
      %vm2605 = vcmp.eq.s32.totalorder %v2589, 1
      %vm2606 = vcmp.eq.s32.totalorder %v2590, 1
      %vm2607 = vcmp.eq.s32.totalorder %v2591, 1
      %vm2608 = vcmp.eq.s32.totalorder %v2592, 1
      %vm2609 = vcmp.eq.s32.totalorder %v2593, 1
      %vm2610 = vcmp.eq.s32.totalorder %v2594, 1
      %vm2611 = vcmp.eq.s32.totalorder %v2595, 1
      %vm2612 = vcmp.eq.s32.totalorder %v2596, 1
      %v2613 = vsel %vm2597, %v2565, 0.0
      %v2614 = vsel %vm2598, %v2566, 0.0
      %v2615 = vsel %vm2599, %v2567, 0.0
      %v2616 = vsel %vm2600, %v2568, 0.0
      %v2617 = vsel %vm2601, %v2569, 0.0
      %v2618 = vsel %vm2602, %v2570, 0.0
      %v2619 = vsel %vm2603, %v2571, 0.0
      %v2620 = vsel %vm2604, %v2572, 0.0
      %v2621 = vsel %vm2605, %v2573, 0.0
      %v2622 = vsel %vm2606, %v2574, 0.0
      %v2623 = vsel %vm2607, %v2575, 0.0
      %v2624 = vsel %vm2608, %v2576, 0.0
      %v2625 = vsel %vm2609, %v2577, 0.0
      %v2626 = vsel %vm2610, %v2578, 0.0
      %v2627 = vsel %vm2611, %v2579, 0.0
      %v2628 = vsel %vm2612, %v2580, 0.0
      %v2629 = vpack.c.bf16 %v2614, %v2613
      %v2630 = vpack.c.bf16 %v2616, %v2615
      %v2631 = vpack.c.bf16 %v2618, %v2617
      %v2632 = vpack.c.bf16 %v2620, %v2619
      %v2633 = vpack.c.bf16 %v2622, %v2621
      %v2634 = vpack.c.bf16 %v2624, %v2623
      %v2635 = vpack.c.bf16 %v2626, %v2625
      %v2636 = vpack.c.bf16 %v2628, %v2627
      %v2645 = vunpack.c.l.b16 %v2629
      %v2646 = vunpack.c.h.b16 %v2629
      %v2647 = vunpack.c.l.b16 %v2630
      %v2648 = vunpack.c.h.b16 %v2630
      %v2649 = vunpack.c.l.b16 %v2631
      %v2650 = vunpack.c.h.b16 %v2631
      %v2651 = vunpack.c.l.b16 %v2632
      %v2652 = vunpack.c.h.b16 %v2632
      %v2653 = vunpack.c.l.b16 %v2633
      %v2654 = vunpack.c.h.b16 %v2633
      %v2655 = vunpack.c.l.b16 %v2634
      %v2656 = vunpack.c.h.b16 %v2634
      %v2657 = vunpack.c.l.b16 %v2635
      %v2658 = vunpack.c.h.b16 %v2635
      %v2659 = vunpack.c.l.b16 %v2636
      %v2660 = vunpack.c.h.b16 %v2636
      %v2661 = vpack.c.b16 %v2645, %v2645
      %v2662 = vpack.c.b16 %v2646, %v2646
      %v2663 = vpack.c.b16 %v2647, %v2647
      %v2664 = vpack.c.b16 %v2648, %v2648
      %v2665 = vpack.c.b16 %v2649, %v2649
      %v2666 = vpack.c.b16 %v2650, %v2650
      %v2667 = vpack.c.b16 %v2651, %v2651
      %v2668 = vpack.c.b16 %v2652, %v2652
      %v2669 = vpack.c.b16 %v2653, %v2653
      %v2670 = vpack.c.b16 %v2654, %v2654
      %v2671 = vpack.c.b16 %v2655, %v2655
      %v2672 = vpack.c.b16 %v2656, %v2656
      %v2673 = vpack.c.b16 %v2657, %v2657
      %v2674 = vpack.c.b16 %v2658, %v2658
      %v2675 = vpack.c.b16 %v2659, %v2659
      %v2676 = vpack.c.b16 %v2660, %v2660
      %2693 = vst.msk [vmem:[%s221 + $0x20] sm:$0xf] %vm223, %v2661
      %2694 = vst.msk [vmem:[%s221 + $0x24] sm:$0xf] %vm223, %v2662
      %2695 = vst.msk [vmem:[%s221 + $0x28] sm:$0xf] %vm223, %v2663
      %2696 = vst.msk [vmem:[%s221 + $0x2c] sm:$0xf] %vm223, %v2664
      %2697 = vst.msk [vmem:[%s221 + $0x30] sm:$0xf] %vm223, %v2665
      %2698 = vst.msk [vmem:[%s221 + $0x34] sm:$0xf] %vm223, %v2666
      %2699 = vst.msk [vmem:[%s221 + $0x38] sm:$0xf] %vm223, %v2667
      %2700 = vst.msk [vmem:[%s221 + $0x3c] sm:$0xf] %vm223, %v2668
      %2701 = vst.msk [vmem:[%s221 + $0x40] sm:$0xf] %vm223, %v2669
      %2702 = vst.msk [vmem:[%s221 + $0x44] sm:$0xf] %vm223, %v2670
      %2703 = vst.msk [vmem:[%s221 + $0x48] sm:$0xf] %vm223, %v2671
      %2704 = vst.msk [vmem:[%s221 + $0x4c] sm:$0xf] %vm223, %v2672
      %2705 = vst.msk [vmem:[%s221 + $0x50] sm:$0xf] %vm223, %v2673
      %2706 = vst.msk [vmem:[%s221 + $0x54] sm:$0xf] %vm223, %v2674
      %2707 = vst.msk [vmem:[%s221 + $0x58] sm:$0xf] %vm223, %v2675
      %2708 = vst.msk [vmem:[%s221 + $0x5c] sm:$0xf] %vm223, %v2676
      %p2709 = scmp.lt.s32.totalorder %s19, 1
      %s2710 = scalar_select %p2709, %s19, 1
      %p2711 = scmp.lt.s32.totalorder %s18, 0
      %s2712 = scalar_select %p2711, %s18, 0
      %s2713 = smul.addr %s2710, 32
      %s2714 = sadd.s32 %s2712, %s2713
      %s2715 = smul.addr %s2714, 4
      %s2716 = scalar_lea.vmem %s3, %s2715
      // Predicated region
      $region33: #{tpu_custom_call.1} parent=31 // pred_check
        %p2717 = pneg %p124
      $region34: #{tpu_custom_call.1} parent=31 // pred_check_branch
        %2719 = sbr.rel (%p2717) target = $region36
      $region35: #{tpu_custom_call.1} parent=31 // pred_region
        _
      $region36: #{tpu_custom_call.1} parent=31 // pred_fallthru
        _
    $region32: #{tpu_custom_call.1} parent=5 // pred_fallthru
      _
    %p2720 = scmp.le.s32.totalorder 2, %s9
    // Predicated region
    $region37: #{tpu_custom_call.1} parent=5 // pred_check
      %p2721 = pneg %p2720
    $region38: #{tpu_custom_call.1} parent=5 // pred_check_branch
      %2723 = sbr.rel (%p2721) target = $region40
    $region39: #{tpu_custom_call.1} parent=5 // pred_region
      %s2724 = ssub.s32 %s9, 2
      // Predicated region
      $region41: #{tpu_custom_call.1} parent=39 // pred_check
        %p2725 = pneg %p130
      $region42: #{tpu_custom_call.1} parent=39 // pred_check_branch
        %2727 = sbr.rel (%p2725) target = $region44
      $region43: #{tpu_custom_call.1} parent=39 // pred_region
        %p2728 = scmp.lt.s32.totalorder %s21, 1
        %s2729 = scalar_select %p2728, %s21, 1
        %p2730 = scmp.lt.s32.totalorder %s20, 0
        %s2731 = scalar_select %p2730, %s20, 0
        %s2732 = smul.addr %s2729, 32
        %s2733 = sadd.s32 %s2731, %s2732
        %s2734 = smul.addr %s2733, 4
        %s2735 = scalar_lea.vmem %s3, %s2734
      $region44: #{tpu_custom_call.1} parent=39 // pred_fallthru
        _
    $region40: #{tpu_custom_call.1} parent=5 // pred_fallthru
      _
  $region6: #{tpu_custom_call.1} parent=0 // loop_footer
    %s13 = sadd.s32 1, %s9
  $region7: #{tpu_custom_call.1} parent=0 // loop_footer_branch
    %8 = sbr.rel target = $region3
  $region8: #{tpu_custom_call.1} parent=0 // loop_exit
    _

</llo_original>
